<compile_context>
chip_gen: v7x
topology: tpu7x:2x2x1
jax: 0.10.0
libtpu: 0.0.40
codegen_flags: <defaults>
</compile_context>

<pallas_src>
import jax
import jax.numpy as jnp
from jax import lax
from jax.experimental import pallas as pl
from jax.experimental.pallas import tpu as pltpu

GROUPS = 32
EPS = 1e-6


# --------------------------------------------------------------------------- #
# Kernel 1: GroupNorm + fused QKV projection (one batch element per grid step) #
# --------------------------------------------------------------------------- #
def _gn_qkv_kernel(x_ref, gamma_ref, beta_ref, mt_ref, w_ref, b_ref, qkv_ref):
    x = x_ref[0]                                      # (hw, c) f32
    hw, c = x.shape
    inv_n = 1.0 / float(hw * (c // GROUPS))

    # GroupNorm with two-pass (centered) statistics.  Per-channel sums are folded
    # to per-group values (and broadcast back to channels) with matmuls against
    # the (G, c) membership matrix, avoiding any lane-dimension reshape.
    sum_c = jnp.sum(x, axis=0, keepdims=True)                                  # (1, c)
    gmean = lax.dot_general(sum_c, mt_ref[...], (((1,), (1,)), ((), ())),
                            preferred_element_type=jnp.float32) * inv_n        # (1, G)
    mean_c = jnp.dot(gmean, mt_ref[...], preferred_element_type=jnp.float32)   # (1, c)
    d = x - mean_c                                                             # (hw, c)
    ssq_c = jnp.sum(d * d, axis=0, keepdims=True)                              # (1, c)
    gvar = lax.dot_general(ssq_c, mt_ref[...], (((1,), (1,)), ((), ())),
                           preferred_element_type=jnp.float32) * inv_n         # (1, G)
    var_c = jnp.dot(gvar, mt_ref[...], preferred_element_type=jnp.float32)     # (1, c)

    # Fused affine: h = (x - mean) * (rstd * gamma) + beta
    scale = lax.rsqrt(var_c + EPS) * gamma_ref[...]                            # (1, c)
    h = (d * scale + beta_ref[...]).astype(jnp.bfloat16)                       # (hw, c) bf16

    # Fused 1x1-conv projections: single bf16 (hw, c) x (c, 3c) MXU matmul,
    # f32 accumulation, f32 bias add, then store as bf16 (lane-dense 3c).
    qkv = jnp.dot(h, w_ref[...], preferred_element_type=jnp.float32) + b_ref[...]
    qkv_ref[0] = qkv.astype(qkv_ref.dtype)


# --------------------------------------------------------------------------- #
# Kernel 2: flash-style attention + residual (grid = (batch, q-tile, kv-tile)) #
# --------------------------------------------------------------------------- #
def _attn_kernel(x_ref, q_ref, k_ref, v_ref, o_ref, m_sc, l_sc, acc_sc):
    ki = pl.program_id(2)

    @pl.when(ki == 0)
    def _():
        m_sc[...] = jnp.full_like(m_sc, -jnp.inf)
        l_sc[...] = jnp.zeros_like(l_sc)
        acc_sc[...] = jnp.zeros_like(acc_sc)

    q = q_ref[0]                                      # (tq, c) bf16 (scale pre-folded)
    k = k_ref[0]                                      # (tk, c) bf16
    v = v_ref[0]                                      # (tk, c) bf16

    # scores s[i, j] = <q_i, k_j>  (c^{-0.5} already folded into q projection)
    s = lax.dot_general(q, k, (((1,), (1,)), ((), ())),
                        preferred_element_type=jnp.float32)          # (tq, tk) f32

    # online softmax update
    m_prev = m_sc[...]                                               # (tq, 1)
    m_new = jnp.maximum(m_prev, jnp.max(s, axis=-1, keepdims=True))
    alpha = jnp.exp(m_prev - m_new)
    p = jnp.exp(s - m_new)
    l_sc[...] = alpha * l_sc[...] + jnp.sum(p, axis=-1, keepdims=True)
    acc_sc[...] = alpha * acc_sc[...] + jnp.dot(
        p.astype(jnp.bfloat16), v, preferred_element_type=jnp.float32)
    m_sc[...] = m_new

    @pl.when(ki == pl.num_programs(2) - 1)
    def _():
        inv_l = pl.reciprocal(l_sc[...], approx=True)                # EUP, ~free
        o_ref[0] = (x_ref[0] + acc_sc[...] * inv_l).astype(o_ref.dtype)


# --------------------------------------------------------------------------- #
# Wrapper                                                                      #
# --------------------------------------------------------------------------- #
def _pick_tile(n, candidates):
    for t in candidates:
        if n % t == 0:
            return t
    return n


def _vmem_limit_bytes():
    try:
        return int(pltpu.get_tpu_info().vmem_capacity_bytes * 0.8)
    except Exception:
        return None


def _compiler_params(dimension_semantics):
    kwargs = dict(dimension_semantics=dimension_semantics)
    lim = _vmem_limit_bytes()
    if lim is not None:
        kwargs["vmem_limit_bytes"] = lim
    return pltpu.CompilerParams(**kwargs)


def nonlocal_block(x, gamma, beta, wq, bq, wk, bk, wv, bv, *, tq=None, tk=None):
    """NonLocalBlock forward. x: NCHW float32. Returns NCHW float32."""
    b, c, hh, ww = x.shape
    assert c % GROUPS == 0, "GroupNorm(32) requires channels divisible by 32"
    hw = hh * ww

    if tq is None:
        tq = _pick_tile(hw, (256, 128))        # q-tile <= 256 (v7x 64 MiB budget)
    if tk is None:
        tk = _pick_tile(hw, (512, 256, 128))
    assert hw % tq == 0 and hw % tk == 0

    xl = jnp.transpose(x, (0, 2, 3, 1)).reshape(b, hw, c).astype(jnp.float32)

    # Group membership matrix (G, c): mt[g, ch] = 1 iff channel ch is in group g.
    gs = c // GROUPS
    mt = (jnp.arange(GROUPS)[:, None] == (jnp.arange(c)[None, :] // gs)).astype(jnp.float32)

    # Fold the attention scale c^{-0.5} into Wq/bq; fuse Q|K|V into one (c, 3c) matmul.
    scale = float(c) ** -0.5
    w_qkv = jnp.concatenate([(wq * scale).T, wk.T, wv.T], axis=1).astype(jnp.bfloat16)
    b_qkv = jnp.concatenate([bq * scale, bk, bv]).reshape(1, 3 * c).astype(jnp.float32)

    const2 = lambda i: (0, 0)

    # ---- pass 1: GroupNorm + fused QKV projection ----
    qkv = pl.pallas_call(
        _gn_qkv_kernel,
        out_shape=jax.ShapeDtypeStruct((b, hw, 3 * c), jnp.bfloat16),
        grid_spec=pltpu.PrefetchScalarGridSpec(
            num_scalar_prefetch=0,
            grid=(b,),
            in_specs=[
                pl.BlockSpec((1, hw, c), lambda i: (i, 0, 0)),   # x
                pl.BlockSpec((1, c), const2),                    # gamma
                pl.BlockSpec((1, c), const2),                    # beta
                pl.BlockSpec((GROUPS, c), const2),               # group membership M^T
                pl.BlockSpec((c, 3 * c), const2),                # [Wq*s | Wk | Wv]^T (bf16)
                pl.BlockSpec((1, 3 * c), const2),                # [bq*s | bk | bv]
            ],
            out_specs=pl.BlockSpec((1, hw, 3 * c), lambda i: (i, 0, 0)),
        ),
        compiler_params=_compiler_params(("parallel",)),
    )(xl,
      gamma.reshape(1, c).astype(jnp.float32),
      beta.reshape(1, c).astype(jnp.float32),
      mt, w_qkv, b_qkv)

    # ---- pass 2: tiled online-softmax attention + residual ----
    out = pl.pallas_call(
        _attn_kernel,
        out_shape=jax.ShapeDtypeStruct((b, hw, c), jnp.float32),
        grid_spec=pltpu.PrefetchScalarGridSpec(
            num_scalar_prefetch=0,
            grid=(b, hw // tq, hw // tk),
            in_specs=[
                pl.BlockSpec((1, tq, c), lambda bi, qi, ki: (bi, qi, 0)),  # x (residual)
                pl.BlockSpec((1, tq, c), lambda bi, qi, ki: (bi, qi, 0)),  # q slice of qkv
                pl.BlockSpec((1, tk, c), lambda bi, qi, ki: (bi, ki, 1)),  # k slice of qkv
                pl.BlockSpec((1, tk, c), lambda bi, qi, ki: (bi, ki, 2)),  # v slice of qkv
            ],
            out_specs=pl.BlockSpec((1, tq, c), lambda bi, qi, ki: (bi, qi, 0)),
            scratch_shapes=[
                pltpu.VMEM((tq, 1), jnp.float32),   # running max m
                pltpu.VMEM((tq, 1), jnp.float32),   # running denominator l
                pltpu.VMEM((tq, c), jnp.float32),   # output accumulator
            ],
        ),
        compiler_params=_compiler_params(("parallel", "parallel", "arbitrary")),
    )(xl, qkv, qkv, qkv)

    return jnp.transpose(out.reshape(b, hh, ww, c), (0, 3, 1, 2))


# --------------------------------------------------------------------------- #
# Pure-JAX reference mirroring the PyTorch forward (NCHW, full f32)            #
# --------------------------------------------------------------------------- #
def reference(x, gamma, beta, wq, bq, wk, bk, wv, bv):
    b, c, h, w = x.shape
    xg = x.reshape(b, GROUPS, c // GROUPS, h, w)
    mean = xg.mean(axis=(2, 3, 4), keepdims=True)
    var = ((xg - mean) ** 2).mean(axis=(2, 3, 4), keepdims=True)
    hn = ((xg - mean) / jnp.sqrt(var + EPS)).reshape(b, c, h, w)
    hn = hn * gamma[None, :, None, None] + beta[None, :, None, None]
    hf = hn.reshape(b, c, h * w)                                   # (b, c, hw)
    q = jnp.einsum('oc,bcn->bon', wq, hf) + bq[None, :, None]
    k = jnp.einsum('oc,bcn->bon', wk, hf) + bk[None, :, None]
    v = jnp.einsum('oc,bcn->bon', wv, hf) + bv[None, :, None]
    qb = jnp.transpose(q, (0, 2, 1))                               # (b, hw, c)
    attn = jnp.einsum('bic,bcj->bij', qb, k) * (c ** -0.5)
    attn = jax.nn.softmax(attn, axis=2)
    attn_t = jnp.transpose(attn, (0, 2, 1))
    A = jnp.einsum('bcj,bji->bci', v, attn_t).reshape(b, c, h, w)
    return x + A


if __name__ == "__main__":
    # c multiple of 32 (GroupNorm) and of 128 (lane-dense); spatial 16x16 -> hw=256.
    B, C, H, W = 2, 128, 16, 16

    key = jax.random.PRNGKey(0)
    ks = jax.random.split(key, 10)
    x = jax.random.normal(ks[0], (B, C, H, W), dtype=jnp.float32)
    gamma = 1.0 + 0.1 * jax.random.normal(ks[1], (C,), dtype=jnp.float32)
    beta = 0.1 * jax.random.normal(ks[2], (C,), dtype=jnp.float32)
    wq = 0.1 * jax.random.normal(ks[3], (C, C), dtype=jnp.float32)
    bq = 0.1 * jax.random.normal(ks[4], (C,), dtype=jnp.float32)
    wk = 0.1 * jax.random.normal(ks[5], (C, C), dtype=jnp.float32)
    bk = 0.1 * jax.random.normal(ks[6], (C,), dtype=jnp.float32)
    wv = 0.1 * jax.random.normal(ks[7], (C, C), dtype=jnp.float32)
    bv = 0.1 * jax.random.normal(ks[8], (C,), dtype=jnp.float32)
    # TODO(synk): proj_out weights exist in __init__ but are unused in forward(); omitted.

    # tq=tk=128 so this small test exercises the multi-tile online-softmax path.
    out = nonlocal_block(x, gamma, beta, wq, bq, wk, bk, wv, bv, tq=128, tk=128)
    out = jax.block_until_ready(out)

    ref = reference(x, gamma, beta, wq, bq, wk, bk, wv, bv)
    assert out.shape == (B, C, H, W)
    max_err = float(jnp.max(jnp.abs(out - ref)))
    mean_err = float(jnp.mean(jnp.abs(out - ref)))
    # bf16 MXU operands + approx reciprocal -> looser tolerance than pure f32.
    assert max_err < 1e-1 and mean_err < 1e-2, (max_err, mean_err)

    print("KERNEL_OK")
</pallas_src>

<mosaic_0001>
module attributes {stable_mosaic.version = 11 : i64} {
  func.func @_gn_qkv_kernel(%arg0: i32, %arg1: memref<1x256x128xf32, #tpu.memory_space<vmem>>, %arg2: memref<1x128xf32, #tpu.memory_space<vmem>>, %arg3: memref<1x128xf32, #tpu.memory_space<vmem>>, %arg4: memref<32x128xf32, #tpu.memory_space<vmem>>, %arg5: memref<128x384xbf16, #tpu.memory_space<vmem>>, %arg6: memref<1x384xf32, #tpu.memory_space<vmem>>, %arg7: memref<1x256x384xbf16, #tpu.memory_space<vmem>>) attributes {dimension_semantics = [#tpu.dimension_semantics<parallel>], iteration_bounds = array<i64: 2>, scalar_prefetch = 0 : i64, scratch_operands = 0 : i64, tpu.core_type = #tpu.core_type<tc>, window_params = [{transform_indices = @transform_0, window_bounds = array<i64: 1, 256, 128>}, {pipeline_mode = #tpu.pipeline_mode<synchronous>, transform_indices = @transform_1, window_bounds = array<i64: 1, 128>}, {pipeline_mode = #tpu.pipeline_mode<synchronous>, transform_indices = @transform_2, window_bounds = array<i64: 1, 128>}, {pipeline_mode = #tpu.pipeline_mode<synchronous>, transform_indices = @transform_3, window_bounds = array<i64: 32, 128>}, {pipeline_mode = #tpu.pipeline_mode<synchronous>, transform_indices = @transform_4, window_bounds = array<i64: 128, 384>}, {pipeline_mode = #tpu.pipeline_mode<synchronous>, transform_indices = @transform_5, window_bounds = array<i64: 1, 384>}, {transform_indices = @transform_6, window_bounds = array<i64: 1, 256, 384>}]} {
    %c0 = arith.constant 0 : index
    %c0_0 = arith.constant 0 : index
    %c0_1 = arith.constant 0 : index
    %0 = vector.load %arg1[%c0, %c0_0, %c0_1] : memref<1x256x128xf32, #tpu.memory_space<vmem>>, vector<1x256x128xf32>
    %1 = vector.shape_cast %0 : vector<1x256x128xf32> to vector<256x128xf32>
    %cst = arith.constant dense<0.000000e+00> : vector<128xf32>
    %2 = vector.multi_reduction <add>, %1, %cst [0] : vector<256x128xf32> to vector<128xf32>
    %3 = vector.shape_cast %2 : vector<128xf32> to vector<1x128xf32>
    %c0_2 = arith.constant 0 : index
    %c0_3 = arith.constant 0 : index
    %4 = vector.load %arg4[%c0_2, %c0_3] : memref<32x128xf32, #tpu.memory_space<vmem>>, vector<32x128xf32>
    %cst_4 = arith.constant dense<0.000000e+00> : vector<1x32xf32>
    %5 = tpu.matmul %3, %4, %cst_4 {dimension_numbers = #tpu.dot_dimension_numbers<[1], [1], [0], [0], [0, 0, 1, 0], [], []>} : vector<1x128xf32>, vector<32x128xf32>, vector<1x32xf32> -> vector<1x32xf32>
    %cst_5 = arith.constant 9.765625E-4 : f32
    %6 = vector.broadcast %cst_5 : f32 to vector<1x32xf32>
    %7 = arith.mulf %5, %6 : vector<1x32xf32>
    %c0_6 = arith.constant 0 : index
    %c0_7 = arith.constant 0 : index
    %8 = vector.load %arg4[%c0_6, %c0_7] : memref<32x128xf32, #tpu.memory_space<vmem>>, vector<32x128xf32>
    %cst_8 = arith.constant dense<0.000000e+00> : vector<1x128xf32>
    %9 = tpu.matmul %7, %8, %cst_8 {dimension_numbers = #tpu.dot_dimension_numbers<[1], [0], [0], [1], [0, 0, 1, 1], [], []>} : vector<1x32xf32>, vector<32x128xf32>, vector<1x128xf32> -> vector<1x128xf32>
    %10 = vector.broadcast %9 : vector<1x128xf32> to vector<256x128xf32>
    %11 = arith.subf %1, %10 : vector<256x128xf32>
    %12 = arith.mulf %11, %11 : vector<256x128xf32>
    %cst_9 = arith.constant dense<0.000000e+00> : vector<128xf32>
    %13 = vector.multi_reduction <add>, %12, %cst_9 [0] : vector<256x128xf32> to vector<128xf32>
    %14 = vector.shape_cast %13 : vector<128xf32> to vector<1x128xf32>
    %c0_10 = arith.constant 0 : index
    %c0_11 = arith.constant 0 : index
    %15 = vector.load %arg4[%c0_10, %c0_11] : memref<32x128xf32, #tpu.memory_space<vmem>>, vector<32x128xf32>
    %cst_12 = arith.constant dense<0.000000e+00> : vector<1x32xf32>
    %16 = tpu.matmul %14, %15, %cst_12 {dimension_numbers = #tpu.dot_dimension_numbers<[1], [1], [0], [0], [0, 0, 1, 0], [], []>} : vector<1x128xf32>, vector<32x128xf32>, vector<1x32xf32> -> vector<1x32xf32>
    %cst_13 = arith.constant 9.765625E-4 : f32
    %17 = vector.broadcast %cst_13 : f32 to vector<1x32xf32>
    %18 = arith.mulf %16, %17 : vector<1x32xf32>
    %c0_14 = arith.constant 0 : index
    %c0_15 = arith.constant 0 : index
    %19 = vector.load %arg4[%c0_14, %c0_15] : memref<32x128xf32, #tpu.memory_space<vmem>>, vector<32x128xf32>
    %cst_16 = arith.constant dense<0.000000e+00> : vector<1x128xf32>
    %20 = tpu.matmul %18, %19, %cst_16 {dimension_numbers = #tpu.dot_dimension_numbers<[1], [0], [0], [1], [0, 0, 1, 1], [], []>} : vector<1x32xf32>, vector<32x128xf32>, vector<1x128xf32> -> vector<1x128xf32>
    %cst_17 = arith.constant 9.99999997E-7 : f32
    %21 = vector.broadcast %cst_17 : f32 to vector<1x128xf32>
    %22 = arith.addf %20, %21 : vector<1x128xf32>
    %23 = math.rsqrt %22 : vector<1x128xf32>
    %c0_18 = arith.constant 0 : index
    %c0_19 = arith.constant 0 : index
    %24 = vector.load %arg2[%c0_18, %c0_19] : memref<1x128xf32, #tpu.memory_space<vmem>>, vector<1x128xf32>
    %25 = arith.mulf %23, %24 : vector<1x128xf32>
    %26 = vector.broadcast %25 : vector<1x128xf32> to vector<256x128xf32>
    %27 = arith.mulf %11, %26 : vector<256x128xf32>
    %c0_20 = arith.constant 0 : index
    %c0_21 = arith.constant 0 : index
    %28 = vector.load %arg3[%c0_20, %c0_21] : memref<1x128xf32, #tpu.memory_space<vmem>>, vector<1x128xf32>
    %29 = vector.broadcast %28 : vector<1x128xf32> to vector<256x128xf32>
    %30 = arith.addf %27, %29 : vector<256x128xf32>
    %31 = arith.truncf %30 : vector<256x128xf32> to vector<256x128xbf16>
    %c0_22 = arith.constant 0 : index
    %c0_23 = arith.constant 0 : index
    %32 = vector.load %arg5[%c0_22, %c0_23] : memref<128x384xbf16, #tpu.memory_space<vmem>>, vector<128x384xbf16>
    %cst_24 = arith.constant dense<0.000000e+00> : vector<256x384xf32>
    %33 = tpu.matmul %31, %32, %cst_24 {dimension_numbers = #tpu.dot_dimension_numbers<[1], [0], [0], [1], [0, 0, 1, 1], [], []>} : vector<256x128xbf16>, vector<128x384xbf16>, vector<256x384xf32> -> vector<256x384xf32>
    %c0_25 = arith.constant 0 : index
    %c0_26 = arith.constant 0 : index
    %34 = vector.load %arg6[%c0_25, %c0_26] : memref<1x384xf32, #tpu.memory_space<vmem>>, vector<1x384xf32>
    %35 = vector.broadcast %34 : vector<1x384xf32> to vector<256x384xf32>
    %36 = arith.addf %33, %35 : vector<256x384xf32>
    %37 = arith.truncf %36 : vector<256x384xf32> to vector<256x384xbf16>
    %c0_27 = arith.constant 0 : index
    %c0_28 = arith.constant 0 : index
    %c0_29 = arith.constant 0 : index
    %38 = vector.load %arg7[%c0_27, %c0_28, %c0_29] : memref<1x256x384xbf16, #tpu.memory_space<vmem>>, vector<1x256x384xbf16>
    %39 = vector.shape_cast %38 : vector<1x256x384xbf16> to vector<256x384xbf16>
    %40 = vector.shape_cast %37 : vector<256x384xbf16> to vector<1x256x384xbf16>
    tpu.vector_store %arg7[%c0_27, %c0_28, %c0_29], %40 {strides = array<i32>} : memref<1x256x384xbf16, #tpu.memory_space<vmem>>, vector<1x256x384xbf16>,
    return
  }
  func.func @transform_0(%arg0: i32) -> (i32, i32, i32) {
    %c0_i32 = arith.constant 0 : i32
    %c0_i32_0 = arith.constant 0 : i32
    %c0_i32_1 = arith.constant 0 : i32
    return %arg0, %c0_i32, %c0_i32_0 : i32, i32, i32
  }
  func.func @transform_1(%arg0: i32) -> (i32, i32) {
    %c0_i32 = arith.constant 0 : i32
    %c0_i32_0 = arith.constant 0 : i32
    %c0_i32_1 = arith.constant 0 : i32
    return %c0_i32, %c0_i32_0 : i32, i32
  }
  func.func @transform_2(%arg0: i32) -> (i32, i32) {
    %c0_i32 = arith.constant 0 : i32
    %c0_i32_0 = arith.constant 0 : i32
    %c0_i32_1 = arith.constant 0 : i32
    return %c0_i32, %c0_i32_0 : i32, i32
  }
  func.func @transform_3(%arg0: i32) -> (i32, i32) {
    %c0_i32 = arith.constant 0 : i32
    %c0_i32_0 = arith.constant 0 : i32
    %c0_i32_1 = arith.constant 0 : i32
    return %c0_i32, %c0_i32_0 : i32, i32
  }
  func.func @transform_4(%arg0: i32) -> (i32, i32) {
    %c0_i32 = arith.constant 0 : i32
    %c0_i32_0 = arith.constant 0 : i32
    %c0_i32_1 = arith.constant 0 : i32
    return %c0_i32, %c0_i32_0 : i32, i32
  }
  func.func @transform_5(%arg0: i32) -> (i32, i32) {
    %c0_i32 = arith.constant 0 : i32
    %c0_i32_0 = arith.constant 0 : i32
    %c0_i32_1 = arith.constant 0 : i32
    return %c0_i32, %c0_i32_0 : i32, i32
  }
  func.func @transform_6(%arg0: i32) -> (i32, i32, i32) {
    %c0_i32 = arith.constant 0 : i32
    %c0_i32_0 = arith.constant 0 : i32
    %c0_i32_1 = arith.constant 0 : i32
    return %arg0, %c0_i32, %c0_i32_0 : i32, i32, i32
  }
}

</mosaic_0001>

<llo_original>
// kernel: tpu_custom_call.1
$region0: #{tpu_custom_call.1}
  #allocation0 [shape = 'u32[]', space=smem, size = 0x4, offset = 0x4, fixed_abs, tag = 'smem constant byte address 0x4 - core index']
  #allocation1 [shape = 'u32[144,128]{1,0:T(1,128)}', space=vmem, size = 0x12000, scoped, tag = 'internal scratch']
  %s0 = inlined_call_operand.hbm [shape: f32[2,256,128], index: 0, kind: input, shape index: {}]
  %s1 = inlined_call_operand.vmem [shape: f32[1,128], index: 1, kind: input, shape index: {}]
  %s2 = inlined_call_operand.vmem [shape: f32[1,128], index: 2, kind: input, shape index: {}]
  %s3 = inlined_call_operand.hbm [shape: f32[32,128], index: 3, kind: input, shape index: {}]
  %s4 = inlined_call_operand.hbm [shape: bf16[128,384], index: 4, kind: input, shape index: {}]
  %s5 = inlined_call_operand.vmem [shape: f32[1,384], index: 5, kind: input, shape index: {}]
  %s6 = inlined_call_operand.hbm [shape: bf16[2,256,384], index: 6, kind: output, shape index: {}]
  %s7 = sld [smem:[#allocation0]]
  $region69: #{tpu_custom_call.1} parent=0
    _
  %s9 = ssub.s32 1, %s7
  %s10 = scalar_select 0, %s9, %s7
  $region1: #{tpu_custom_call.1} parent=0
    #allocation2 [shape = 'u8[262144]{0}', space=vmem, size = 0x40000, scoped, tag = 'input window, operand 0']
    #allocation3 [shape = 's32[2]{0}', space=sflag, size = 0x8, scoped, tag = 'scoped memory for tpu_custom_call.1']
    #allocation4 [shape = 's32[2]{0}', space=sflag, size = 0x8, scoped, tag = 'scoped memory for tpu_custom_call.1']
    #allocation5 [shape = 'u8[16384]{0}', space=vmem, size = 0x4000, scoped, tag = 'input window, operand 3, single buffered']
    #allocation6 [shape = 's32[1]{0}', space=sflag, size = 0x4, scoped, tag = 'scoped memory for tpu_custom_call.1']
    #allocation7 [shape = 'u8[98304]{0}', space=vmem, size = 0x18000, scoped, tag = 'input window, operand 4, single buffered']
    #allocation8 [shape = 'u8[393216]{0}', space=vmem, size = 0x60000, scoped, tag = 'output window, operand 0']
    %11 = vsyncpa [#allocation3], 0
    %s12 = scalar_lea.sflag [#allocation3], 1
    %13 = vsyncpa %s12, 0
    %14 = vsyncpa [#allocation6], 0
    %15 = vsyncpa [#allocation4], 0
    %s16 = scalar_lea.sflag [#allocation4], 1
    %17 = vsyncpa %s16, 0
    loop: start=0, step=1, limit=4
    $region2: #{tpu_custom_call.1} parent=1 // loop_pre_header
      _
    $region3: #{tpu_custom_call.1} parent=1 // loop_header
      %s19 = sphi 0, %s23
      %p20 = scmp.ge.s32.totalorder %s19, 4
      %s29 = sphi 0, %s31
      %s32 = sphi 0, %s29
      %s33 = sphi 0, %s32
      %s49 = sphi 0, %s33
      %s53 = sphi 0, %s53
      %s55 = sphi 0, %s53
      %s56 = sphi 0, %s55
      %s70 = sphi 0, %s56
      %s74 = sphi 0, %s74
      %s76 = sphi 0, %s74
      %s77 = sphi 0, %s76
      %s91 = sphi 0, %s77
      %s95 = sphi 0, %s95
      %s97 = sphi 0, %s95
      %s98 = sphi 0, %s97
      %s112 = sphi 0, %s98
      %s116 = sphi 0, %s116
      %s118 = sphi 0, %s116
      %s119 = sphi 0, %s118
      %s133 = sphi 0, %s119
      %s137 = sphi 0, %s137
      %s139 = sphi 0, %s137
      %s140 = sphi 0, %s139
      %s154 = sphi 0, %s140
      %s160 = sphi 0, %s162
      %s163 = sphi 0, %s160
      %s164 = sphi 0, %s163
      %s180 = sphi 0, %s164
    $region4: #{tpu_custom_call.1} parent=1 // loop_header_branch
      %22 = sbr.rel (%p20) target = $region8
    $region5: #{tpu_custom_call.1} parent=1 // loop_body
      %s24 = ssub.s32 %s19, 1
      %s25 = ssub.s32 %s19, 2
      %s26 = sadd.s32 %s19, 1
      %s27 = ssub.s32 %s19, %s26
      %p28 = scmp.eq.s32.totalorder %s27, 0
      %s30 = sadd.s32 %s29, 1
      %s31 = scalar_select %p28, %s29, %s30
      %p34 = pneg %p28
      %p35 = scmp.eq.s32.totalorder %s19, 1
      %p36 = por %p34, %p35
      %p37 = scmp.ne.s32.totalorder %s29, %s32
      %p38 = scmp.eq.s32.totalorder %s19, 0
      %p39 = por %p37, %p38
      %p40 = scmp.ne.s32.totalorder %s29, %s32
      %p41 = scmp.eq.s32.totalorder %s24, 1
      %p42 = por %p40, %p41
      %p43 = scmp.ne.s32.totalorder %s32, %s33
      %p44 = scmp.eq.s32.totalorder %s24, 0
      %p45 = por %p43, %p44
      %p46 = scmp.ne.s32.totalorder %s32, %s33
      %p47 = scmp.eq.s32.totalorder %s25, 1
      %p48 = por %p46, %p47
      %p50 = scmp.ne.s32.totalorder %s33, %s49
      %p51 = scmp.eq.s32.totalorder %s25, 0
      %p52 = por %p50, %p51
      %s54 = sadd.s32 %s53, 1
      %p57 = scmp.eq.s32.totalorder %s19, 1
      %p58 = scmp.ne.s32.totalorder %s53, %s55
      %p59 = scmp.eq.s32.totalorder %s19, 0
      %p60 = por %p58, %p59
      %p61 = scmp.ne.s32.totalorder %s53, %s55
      %p62 = scmp.eq.s32.totalorder %s24, 1
      %p63 = por %p61, %p62
      %p64 = scmp.ne.s32.totalorder %s55, %s56
      %p65 = scmp.eq.s32.totalorder %s24, 0
      %p66 = por %p64, %p65
      %p67 = scmp.ne.s32.totalorder %s55, %s56
      %p68 = scmp.eq.s32.totalorder %s25, 1
      %p69 = por %p67, %p68
      %p71 = scmp.ne.s32.totalorder %s56, %s70
      %p72 = scmp.eq.s32.totalorder %s25, 0
      %p73 = por %p71, %p72
      %s75 = sadd.s32 %s74, 1
      %p78 = scmp.eq.s32.totalorder %s19, 1
      %p79 = scmp.ne.s32.totalorder %s74, %s76
      %p80 = scmp.eq.s32.totalorder %s19, 0
      %p81 = por %p79, %p80
      %p82 = scmp.ne.s32.totalorder %s74, %s76
      %p83 = scmp.eq.s32.totalorder %s24, 1
      %p84 = por %p82, %p83
      %p85 = scmp.ne.s32.totalorder %s76, %s77
      %p86 = scmp.eq.s32.totalorder %s24, 0
      %p87 = por %p85, %p86
      %p88 = scmp.ne.s32.totalorder %s76, %s77
      %p89 = scmp.eq.s32.totalorder %s25, 1
      %p90 = por %p88, %p89
      %p92 = scmp.ne.s32.totalorder %s77, %s91
      %p93 = scmp.eq.s32.totalorder %s25, 0
      %p94 = por %p92, %p93
      %s96 = sadd.s32 %s95, 1
      %p99 = scmp.eq.s32.totalorder %s19, 1
      %p100 = scmp.ne.s32.totalorder %s95, %s97
      %p101 = scmp.eq.s32.totalorder %s19, 0
      %p102 = por %p100, %p101
      %p103 = scmp.ne.s32.totalorder %s95, %s97
      %p104 = scmp.eq.s32.totalorder %s24, 1
      %p105 = por %p103, %p104
      %p106 = scmp.ne.s32.totalorder %s97, %s98
      %p107 = scmp.eq.s32.totalorder %s24, 0
      %p108 = por %p106, %p107
      %p109 = scmp.ne.s32.totalorder %s97, %s98
      %p110 = scmp.eq.s32.totalorder %s25, 1
      %p111 = por %p109, %p110
      %p113 = scmp.ne.s32.totalorder %s98, %s112
      %p114 = scmp.eq.s32.totalorder %s25, 0
      %p115 = por %p113, %p114
      %s117 = sadd.s32 %s116, 1
      %p120 = scmp.eq.s32.totalorder %s19, 1
      %p121 = scmp.ne.s32.totalorder %s116, %s118
      %p122 = scmp.eq.s32.totalorder %s19, 0
      %p123 = por %p121, %p122
      %p124 = scmp.ne.s32.totalorder %s116, %s118
      %p125 = scmp.eq.s32.totalorder %s24, 1
      %p126 = por %p124, %p125
      %p127 = scmp.ne.s32.totalorder %s118, %s119
      %p128 = scmp.eq.s32.totalorder %s24, 0
      %p129 = por %p127, %p128
      %p130 = scmp.ne.s32.totalorder %s118, %s119
      %p131 = scmp.eq.s32.totalorder %s25, 1
      %p132 = por %p130, %p131
      %p134 = scmp.ne.s32.totalorder %s119, %s133
      %p135 = scmp.eq.s32.totalorder %s25, 0
      %p136 = por %p134, %p135
      %s138 = sadd.s32 %s137, 1
      %p141 = scmp.eq.s32.totalorder %s19, 1
      %p142 = scmp.ne.s32.totalorder %s137, %s139
      %p143 = scmp.eq.s32.totalorder %s19, 0
      %p144 = por %p142, %p143
      %p145 = scmp.ne.s32.totalorder %s137, %s139
      %p146 = scmp.eq.s32.totalorder %s24, 1
      %p147 = por %p145, %p146
      %p148 = scmp.ne.s32.totalorder %s139, %s140
      %p149 = scmp.eq.s32.totalorder %s24, 0
      %p150 = por %p148, %p149
      %p151 = scmp.ne.s32.totalorder %s139, %s140
      %p152 = scmp.eq.s32.totalorder %s25, 1
      %p153 = por %p151, %p152
      %p155 = scmp.ne.s32.totalorder %s140, %s154
      %p156 = scmp.eq.s32.totalorder %s25, 0
      %p157 = por %p155, %p156
      %s158 = ssub.s32 %s19, %s26
      %p159 = scmp.eq.s32.totalorder %s158, 0
      %s161 = sadd.s32 %s160, 1
      %s162 = scalar_select %p159, %s160, %s161
      %p165 = pneg %p159
      %p166 = scmp.eq.s32.totalorder %s19, 1
      %p167 = por %p165, %p166
      %p168 = scmp.ne.s32.totalorder %s160, %s163
      %p169 = scmp.eq.s32.totalorder %s19, 0
      %p170 = por %p168, %p169
      %p171 = scmp.ne.s32.totalorder %s160, %s163
      %p172 = scmp.eq.s32.totalorder %s24, 1
      %p173 = por %p171, %p172
      %p174 = scmp.ne.s32.totalorder %s163, %s164
      %p175 = scmp.eq.s32.totalorder %s24, 0
      %p176 = por %p174, %p175
      %p177 = scmp.ne.s32.totalorder %s163, %s164
      %p178 = scmp.eq.s32.totalorder %s25, 1
      %p179 = por %p177, %p178
      %p181 = scmp.ne.s32.totalorder %s164, %s180
      %p182 = scmp.eq.s32.totalorder %s25, 0
      %p183 = por %p181, %p182
      %p184 = scmp.le.s32.totalorder 1, %s19
      %p185 = scmp.lt.s32.totalorder %s19, 3
      %p186 = pnand %p184, %p185
      %p187 = pneg %p186
      // Predicated region
      $region9: #{tpu_custom_call.1} parent=5 // pred_check
        _
      $region10: #{tpu_custom_call.1} parent=5 // pred_check_branch
        %189 = sbr.rel (%p186) target = $region12
      $region11: #{tpu_custom_call.1} parent=5 // pred_region
        %s190 = ssub.s32 %s19, 1
        // Predicated region
        $region13: #{tpu_custom_call.1} parent=11 // pred_check
          %p191 = pneg %p66
        $region14: #{tpu_custom_call.1} parent=11 // pred_check_branch
          %193 = sbr.rel (%p191) target = $region16
        $region15: #{tpu_custom_call.1} parent=11 // pred_region
          _
        $region16: #{tpu_custom_call.1} parent=11 // pred_fallthru
          _
        // Predicated region
        $region17: #{tpu_custom_call.1} parent=11 // pred_check
          %p194 = pneg %p87
        $region18: #{tpu_custom_call.1} parent=11 // pred_check_branch
          %196 = sbr.rel (%p194) target = $region20
        $region19: #{tpu_custom_call.1} parent=11 // pred_region
          _
        $region20: #{tpu_custom_call.1} parent=11 // pred_fallthru
          _
        // Predicated region
        $region21: #{tpu_custom_call.1} parent=11 // pred_check
          %p197 = pneg %p108
        $region22: #{tpu_custom_call.1} parent=11 // pred_check_branch
          %199 = sbr.rel (%p197) target = $region24
        $region23: #{tpu_custom_call.1} parent=11 // pred_region
          %s201 = ssub.s32 512, 512
          %202 = vsyncadd [#allocation6], %s201
          %s203 = sshll.u32 [#allocation5], 4
          %s204 = int_to_ptr.vmem [resolvable:$true] %s203
          %209 = dma.hbm_to_vmem [thread:$0]  %s3, 512, %s204, [#allocation6], 128, 128, 8
        $region24: #{tpu_custom_call.1} parent=11 // pred_fallthru
          _
        // Predicated region
        $region25: #{tpu_custom_call.1} parent=11 // pred_check
          %p210 = pneg %p129
        $region26: #{tpu_custom_call.1} parent=11 // pred_check_branch
          %212 = sbr.rel (%p210) target = $region28
        $region27: #{tpu_custom_call.1} parent=11 // pred_region
          %s214 = ssub.s32 3072, 3072
          %215 = vsyncadd [#allocation6], %s214
          %s216 = sshll.u32 [#allocation7], 4
          %s217 = int_to_ptr.vmem [resolvable:$true] %s216
          %222 = dma.hbm_to_vmem [thread:$0]  %s4, 3072, %s217, [#allocation6], 192, 192, 12
        $region28: #{tpu_custom_call.1} parent=11 // pred_fallthru
          _
        // Predicated region
        $region29: #{tpu_custom_call.1} parent=11 // pred_check
          %p223 = pneg %p150
        $region30: #{tpu_custom_call.1} parent=11 // pred_check_branch
          %225 = sbr.rel (%p223) target = $region32
        $region31: #{tpu_custom_call.1} parent=11 // pred_region
          _
        $region32: #{tpu_custom_call.1} parent=11 // pred_fallthru
          _
      $region12: #{tpu_custom_call.1} parent=5 // pred_fallthru
        _
      %p226 = scmp.lt.s32.totalorder %s19, 2
      // Predicated region
      $region33: #{tpu_custom_call.1} parent=5 // pred_check
        %p227 = pneg %p226
      $region34: #{tpu_custom_call.1} parent=5 // pred_check_branch
        %229 = sbr.rel (%p227) target = $region36
      $region35: #{tpu_custom_call.1} parent=5 // pred_region
        // Predicated region
        $region37: #{tpu_custom_call.1} parent=35 // pred_check
          %p230 = pneg %p39
        $region38: #{tpu_custom_call.1} parent=35 // pred_check_branch
          %232 = sbr.rel (%p230) target = $region40
        $region39: #{tpu_custom_call.1} parent=35 // pred_region
          %s233 = sand.u32 %s29, 1
          %s234 = scalar_lea.sflag [#allocation3], %s233
          %s235 = sand.u32 %s29, 1
          %s236 = smul.addr %s235, 256
          %s237 = scalar_lea.vmem [#allocation2], %s236
          %s239 = ssub.s32 4096, 4096
          %240 = vsyncadd %s234, %s239
          %s241 = smul.addr %s19, 32
          %s242 = smul.addr %s241, 128
          %s243 = scalar_lea.hbm %s0, %s242
          %s244 = sshll.u32 %s237, 4
          %s245 = int_to_ptr.vmem [resolvable:$true] %s244
          %250 = dma.hbm_to_vmem [thread:$0]  %s243, 4096, %s245, %s234, 128, 128, 8
        $region40: #{tpu_custom_call.1} parent=35 // pred_fallthru
          _
      $region36: #{tpu_custom_call.1} parent=5 // pred_fallthru
        _
      %p251 = scmp.le.s32.totalorder 1, %s19
      %p252 = scmp.lt.s32.totalorder %s19, 3
      %p253 = pnand %p251, %p252
      %p254 = pneg %p253
      // Predicated region
      $region41: #{tpu_custom_call.1} parent=5 // pred_check
        _
      $region42: #{tpu_custom_call.1} parent=5 // pred_check_branch
        %256 = sbr.rel (%p253) target = $region44
      $region43: #{tpu_custom_call.1} parent=5 // pred_region
        %s257 = ssub.s32 %s19, 1
        %s258 = sand.u32 %s32, 1
        %s259 = scalar_lea.sflag [#allocation3], %s258
        %s260 = sand.u32 %s32, 1
        %s261 = smul.addr %s260, 256
        %s262 = scalar_lea.vmem [#allocation2], %s261
        // Predicated region
        $region45: #{tpu_custom_call.1} parent=43 // pred_check
          %p263 = pneg %p45
        $region46: #{tpu_custom_call.1} parent=43 // pred_check_branch
          %265 = sbr.rel (%p263) target = $region48
        $region47: #{tpu_custom_call.1} parent=43 // pred_region
          %266 = dma.done %s259, 4096
        $region48: #{tpu_custom_call.1} parent=43 // pred_fallthru
          _
        // Predicated region
        $region49: #{tpu_custom_call.1} parent=43 // pred_check
          %p267 = pneg %p108
        $region50: #{tpu_custom_call.1} parent=43 // pred_check_branch
          %269 = sbr.rel (%p267) target = $region52
        $region51: #{tpu_custom_call.1} parent=43 // pred_region
          %270 = dma.done [#allocation6], 512
        $region52: #{tpu_custom_call.1} parent=43 // pred_fallthru
          _
        // Predicated region
        $region53: #{tpu_custom_call.1} parent=43 // pred_check
          %p271 = pneg %p129
        $region54: #{tpu_custom_call.1} parent=43 // pred_check_branch
          %273 = sbr.rel (%p271) target = $region56
        $region55: #{tpu_custom_call.1} parent=43 // pred_region
          %274 = dma.done [#allocation6], 3072
        $region56: #{tpu_custom_call.1} parent=43 // pred_fallthru
          _
        %s275 = sand.u32 %s32, 1
        %s276 = scalar_lea.sflag [#allocation3], %s275
        %s277 = sand.u32 %s32, 1
        %s278 = smul.addr %s277, 256
        %s279 = scalar_lea.vmem [#allocation2], %s278
        %p280 = pneg %p45
        %p281 = pneg %p42
        %p282 = pneg %p66
        %p283 = pneg %p63
        %p284 = pneg %p87
        %p285 = pneg %p84
        %p286 = pneg %p108
        %p287 = pneg %p105
        %p288 = pneg %p129
        %p289 = pneg %p126
        %p290 = pneg %p150
        %p291 = pneg %p147
        %p292 = pneg %p176
        %p293 = pneg %p173
        %s294 = sand.u32 %s163, 1
        %s295 = scalar_lea.sflag [#allocation4], %s294
        %s296 = sand.u32 %s163, 1
        %s297 = smul.addr %s296, 384
        %s298 = scalar_lea.vmem [#allocation8], %s297
        %v300 = vld [vmem:[%s262] sm:$0xff]
        %v301 = vld [vmem:[%s262 + $0x8] sm:$0xff]
        %v302 = vld [vmem:[%s262 + $0x10] sm:$0xff]
        %v303 = vld [vmem:[%s262 + $0x18] sm:$0xff]
        %v304 = vld [vmem:[%s262 + $0x20] sm:$0xff]
        %v305 = vld [vmem:[%s262 + $0x28] sm:$0xff]
        %v306 = vld [vmem:[%s262 + $0x30] sm:$0xff]
        %v307 = vld [vmem:[%s262 + $0x38] sm:$0xff]
        %v308 = vld [vmem:[%s262 + $0x40] sm:$0xff]
        %v309 = vld [vmem:[%s262 + $0x48] sm:$0xff]
        %v310 = vld [vmem:[%s262 + $0x50] sm:$0xff]
        %v311 = vld [vmem:[%s262 + $0x58] sm:$0xff]
        %v312 = vld [vmem:[%s262 + $0x60] sm:$0xff]
        %v313 = vld [vmem:[%s262 + $0x68] sm:$0xff]
        %v314 = vld [vmem:[%s262 + $0x70] sm:$0xff]
        %v315 = vld [vmem:[%s262 + $0x78] sm:$0xff]
        %v316 = vld [vmem:[%s262 + $0x80] sm:$0xff]
        %v317 = vld [vmem:[%s262 + $0x88] sm:$0xff]
        %v318 = vld [vmem:[%s262 + $0x90] sm:$0xff]
        %v319 = vld [vmem:[%s262 + $0x98] sm:$0xff]
        %v320 = vld [vmem:[%s262 + $0xa0] sm:$0xff]
        %v321 = vld [vmem:[%s262 + $0xa8] sm:$0xff]
        %v322 = vld [vmem:[%s262 + $0xb0] sm:$0xff]
        %v323 = vld [vmem:[%s262 + $0xb8] sm:$0xff]
        %v324 = vld [vmem:[%s262 + $0xc0] sm:$0xff]
        %v325 = vld [vmem:[%s262 + $0xc8] sm:$0xff]
        %v326 = vld [vmem:[%s262 + $0xd0] sm:$0xff]
        %v327 = vld [vmem:[%s262 + $0xd8] sm:$0xff]
        %v328 = vld [vmem:[%s262 + $0xe0] sm:$0xff]
        %v329 = vld [vmem:[%s262 + $0xe8] sm:$0xff]
        %v330 = vld [vmem:[%s262 + $0xf0] sm:$0xff]
        %v331 = vld [vmem:[%s262 + $0xf8] sm:$0xff]
        %v332 = vadd.f32 %v300, %v301
        %v333 = vadd.f32 %v332, %v302
        %v334 = vadd.f32 %v333, %v303
        %v335 = vadd.f32 %v334, %v304
        %v336 = vadd.f32 %v335, %v305
        %v337 = vadd.f32 %v336, %v306
        %v338 = vadd.f32 %v337, %v307
        %v339 = vadd.f32 %v338, %v308
        %v340 = vadd.f32 %v339, %v309
        %v341 = vadd.f32 %v340, %v310
        %v342 = vadd.f32 %v341, %v311
        %v343 = vadd.f32 %v342, %v312
        %v344 = vadd.f32 %v343, %v313
        %v345 = vadd.f32 %v344, %v314
        %v346 = vadd.f32 %v345, %v315
        %v347 = vadd.f32 %v346, %v316
        %v348 = vadd.f32 %v347, %v317
        %v349 = vadd.f32 %v348, %v318
        %v350 = vadd.f32 %v349, %v319
        %v351 = vadd.f32 %v350, %v320
        %v352 = vadd.f32 %v351, %v321
        %v353 = vadd.f32 %v352, %v322
        %v354 = vadd.f32 %v353, %v323
        %v355 = vadd.f32 %v354, %v324
        %v356 = vadd.f32 %v355, %v325
        %v357 = vadd.f32 %v356, %v326
        %v358 = vadd.f32 %v357, %v327
        %v359 = vadd.f32 %v358, %v328
        %v360 = vadd.f32 %v359, %v329
        %v361 = vadd.f32 %v360, %v330
        %v362 = vadd.f32 %v361, %v331
        %v363 = vrot.slane %v362, 4
        %v364 = vadd.f32 %v362, %v363
        %v365 = vrot.slane %v364, 2
        %v366 = vadd.f32 %v364, %v365
        %v367 = vrot.slane %v366, 1
        %v368 = vadd.f32 %v366, %v367
        %v369 = vld [vmem:[#allocation5] sm:$0xff]
        %v370 = vld [vmem:[#allocation5 + $0x8] sm:$0xff]
        %v371 = vld [vmem:[#allocation5 + $0x10] sm:$0xff]
        %v372 = vld [vmem:[#allocation5 + $0x18] sm:$0xff]
        %373 = vmatprep.subr.mxu0 0.0
        %374 = vmatpush1.xpose.msra.mxu0 %v369
        %375 = vmatprep.subr.mxu0 0.0
        %376 = vmatpush1.xpose.msra.mxu0 %v370
        %377 = vmatprep.subr.mxu0 0.0
        %378 = vmatpush1.xpose.msra.mxu0 %v371
        %379 = vmatprep.subr.mxu0 0.0
        %380 = vmatpush1.xpose.msra.mxu0 %v372
        %381 = vmatprep.subr.mxu0 0.0
        %382 = vmatpush1.xpose.msra.mxu0 0.0
        %383 = vmatprep.subr.mxu0 0.0
        %384 = vmatpush1.xpose.msra.mxu0 0.0
        %385 = vmatprep.subr.mxu0 0.0
        %386 = vmatpush1.xpose.msra.mxu0 0.0
        %387 = vmatprep.subr.mxu0 0.0
        %388 = vmatpush1.xpose.msra.mxu0 0.0
        %389 = vmatprep.subr.mxu0 0.0
        %390 = vmatpush1.xpose.msra.mxu0 0.0
        %391 = vmatprep.subr.mxu0 0.0
        %392 = vmatpush1.xpose.msra.mxu0 0.0
        %393 = vmatprep.subr.mxu0 0.0
        %394 = vmatpush1.xpose.msra.mxu0 0.0
        %395 = vmatprep.subr.mxu0 0.0
        %396 = vmatpush1.xpose.msra.mxu0 0.0
        %397 = vmatprep.subr.mxu0 0.0
        %398 = vmatpush1.xpose.msra.mxu0 0.0
        %399 = vmatprep.subr.mxu0 0.0
        %400 = vmatpush1.xpose.msra.mxu0 0.0
        %401 = vmatprep.subr.mxu0 0.0
        %402 = vmatpush1.xpose.msra.mxu0 0.0
        %403 = vmatprep.subr.mxu0 0.0
        %404 = vmatpush1.xpose.msra.mxu0 0.0
        %405 = vmatprep.subr.mxu0 0.0
        %406 = vmatpush1.xpose.msra.mxu0 0.0
        %407 = vmatprep.subr.mxu0 0.0
        %408 = vmatpush1.xpose.msra.mxu0 0.0
        %409 = vmatprep.subr.mxu0 0.0
        %410 = vmatpush1.xpose.msra.mxu0 0.0
        %411 = vmatprep.subr.mxu0 0.0
        %412 = vmatpush1.xpose.msra.mxu0 0.0
        %413 = vmatprep.subr.mxu0 0.0
        %414 = vmatpush1.xpose.msra.mxu0 0.0
        %415 = vmatprep.subr.mxu0 0.0
        %416 = vmatpush1.xpose.msra.mxu0 0.0
        %417 = vmatprep.subr.mxu0 0.0
        %418 = vmatpush1.xpose.msra.mxu0 0.0
        %419 = vmatprep.subr.mxu0 0.0
        %420 = vmatpush1.xpose.msra.mxu0 0.0
        %421 = vmatprep.subr.mxu0 0.0
        %422 = vmatpush1.xpose.msra.mxu0 0.0
        %423 = vmatprep.subr.mxu0 0.0
        %424 = vmatpush1.xpose.msra.mxu0 0.0
        %425 = vmatprep.subr.mxu0 0.0
        %426 = vmatpush1.xpose.msra.mxu0 0.0
        %427 = vmatprep.subr.mxu0 0.0
        %428 = vmatpush1.xpose.msra.mxu0 0.0
        %429 = vmatprep.subr.mxu0 0.0
        %430 = vmatpush1.xpose.msra.mxu0 0.0
        %431 = vmatprep.subr.mxu0 0.0
        %432 = vmatpush1.xpose.msra.mxu0 0.0
        %433 = vmatprep.subr.mxu0 0.0
        %434 = vmatpush1.xpose.msra.mxu0 0.0
        %435 = vmatprep.subr.mxu0 0.0
        %436 = vmatpush1.xpose.msra.mxu0 0.0
        %437 = vmatprep.mubr.f32.mxu0 0.0
        %438 = vmatmul.mubr.f32.gmra.mrb[0].mxu0 %v368
        %v439 = vpop.f32.mrb[0].mxu0
        %v440 = vadd.f32 0.0, %v439
        %v441 = vpop.f32.mrb[0].mxu0
        %442 = vdwg.mxu0
        %v443 = vmul.f32 %v440, 0.0009765625
        %vm444 = vcmask 261120
        %v446 = vsel %vm444, %v443, 0
        %448 = vmatprep.subr.mxu0 0.0
        %449 = vmatpush1.msra.mxu0 %v369
        %450 = vmatprep.subr.mxu0 0.0
        %451 = vmatpush1.msra.mxu0 %v370
        %452 = vmatprep.subr.mxu0 0.0
        %453 = vmatpush1.msra.mxu0 %v371
        %454 = vmatprep.subr.mxu0 0.0
        %455 = vmatpush1.msra.mxu0 %v372
        %456 = vmatprep.subr.mxu0 0.0
        %457 = vmatpush1.msra.mxu0 0.0
        %458 = vmatprep.subr.mxu0 0.0
        %459 = vmatpush1.msra.mxu0 0.0
        %460 = vmatprep.subr.mxu0 0.0
        %461 = vmatpush1.msra.mxu0 0.0
        %462 = vmatprep.subr.mxu0 0.0
        %463 = vmatpush1.msra.mxu0 0.0
        %464 = vmatprep.subr.mxu0 0.0
        %465 = vmatpush1.msra.mxu0 0.0
        %466 = vmatprep.subr.mxu0 0.0
        %467 = vmatpush1.msra.mxu0 0.0
        %468 = vmatprep.subr.mxu0 0.0
        %469 = vmatpush1.msra.mxu0 0.0
        %470 = vmatprep.subr.mxu0 0.0
        %471 = vmatpush1.msra.mxu0 0.0
        %472 = vmatprep.subr.mxu0 0.0
        %473 = vmatpush1.msra.mxu0 0.0
        %474 = vmatprep.subr.mxu0 0.0
        %475 = vmatpush1.msra.mxu0 0.0
        %476 = vmatprep.subr.mxu0 0.0
        %477 = vmatpush1.msra.mxu0 0.0
        %478 = vmatprep.subr.mxu0 0.0
        %479 = vmatpush1.msra.mxu0 0.0
        %480 = vmatprep.subr.mxu0 0.0
        %481 = vmatpush1.msra.mxu0 0.0
        %482 = vmatprep.subr.mxu0 0.0
        %483 = vmatpush1.msra.mxu0 0.0
        %484 = vmatprep.subr.mxu0 0.0
        %485 = vmatpush1.msra.mxu0 0.0
        %486 = vmatprep.subr.mxu0 0.0
        %487 = vmatpush1.msra.mxu0 0.0
        %488 = vmatprep.subr.mxu0 0.0
        %489 = vmatpush1.msra.mxu0 0.0
        %490 = vmatprep.subr.mxu0 0.0
        %491 = vmatpush1.msra.mxu0 0.0
        %492 = vmatprep.subr.mxu0 0.0
        %493 = vmatpush1.msra.mxu0 0.0
        %494 = vmatprep.subr.mxu0 0.0
        %495 = vmatpush1.msra.mxu0 0.0
        %496 = vmatprep.subr.mxu0 0.0
        %497 = vmatpush1.msra.mxu0 0.0
        %498 = vmatprep.subr.mxu0 0.0
        %499 = vmatpush1.msra.mxu0 0.0
        %500 = vmatprep.subr.mxu0 0.0
        %501 = vmatpush1.msra.mxu0 0.0
        %502 = vmatprep.subr.mxu0 0.0
        %503 = vmatpush1.msra.mxu0 0.0
        %504 = vmatprep.subr.mxu0 0.0
        %505 = vmatpush1.msra.mxu0 0.0
        %506 = vmatprep.subr.mxu0 0.0
        %507 = vmatpush1.msra.mxu0 0.0
        %508 = vmatprep.subr.mxu0 0.0
        %509 = vmatpush1.msra.mxu0 0.0
        %510 = vmatprep.subr.mxu0 0.0
        %511 = vmatpush1.msra.mxu0 0.0
        %512 = vmatprep.mubr.f32.mxu0 0.0
        %513 = vmatmul.mubr.f32.gmra.mrb[0].mxu0 %v446
        %v514 = vpop.f32.mrb[0].mxu0
        %v515 = vadd.f32 0.0, %v514
        %v516 = vpop.f32.mrb[0].mxu0
        %517 = vdwg.mxu0
        %v518 = vlaneseq
        %v519 = vshrl.u32 %v518, 7
        %v520 = vsub.s32 0, %v519
        %v521 = vrot.slane %v515, %v520
        %v522 = vsub.f32 %v300, %v521
        %v523 = vsub.f32 %v301, %v521
        %v524 = vsub.f32 %v302, %v521
        %v525 = vsub.f32 %v303, %v521
        %v526 = vsub.f32 %v304, %v521
        %v527 = vsub.f32 %v305, %v521
        %v528 = vsub.f32 %v306, %v521
        %v529 = vsub.f32 %v307, %v521
        %v530 = vsub.f32 %v308, %v521
        %v531 = vsub.f32 %v309, %v521
        %v532 = vsub.f32 %v310, %v521
        %v533 = vsub.f32 %v311, %v521
        %v534 = vsub.f32 %v312, %v521
        %v535 = vsub.f32 %v313, %v521
        %v536 = vsub.f32 %v314, %v521
        %v537 = vsub.f32 %v315, %v521
        %v538 = vsub.f32 %v316, %v521
        %v539 = vsub.f32 %v317, %v521
        %v540 = vsub.f32 %v318, %v521
        %v541 = vsub.f32 %v319, %v521
        %v542 = vsub.f32 %v320, %v521
        %v543 = vsub.f32 %v321, %v521
        %v544 = vsub.f32 %v322, %v521
        %v545 = vsub.f32 %v323, %v521
        %v546 = vsub.f32 %v324, %v521
        %v547 = vsub.f32 %v325, %v521
        %v548 = vsub.f32 %v326, %v521
        %v549 = vsub.f32 %v327, %v521
        %v550 = vsub.f32 %v328, %v521
        %v551 = vsub.f32 %v329, %v521
        %v552 = vsub.f32 %v330, %v521
        %v553 = vsub.f32 %v331, %v521
        %v554 = vmul.f32 %v522, %v522
        %v555 = vmul.f32 %v523, %v523
        %v556 = vmul.f32 %v524, %v524
        %v557 = vmul.f32 %v525, %v525
        %v558 = vmul.f32 %v526, %v526
        %v559 = vmul.f32 %v527, %v527
        %v560 = vmul.f32 %v528, %v528
        %v561 = vmul.f32 %v529, %v529
        %v562 = vmul.f32 %v530, %v530
        %v563 = vmul.f32 %v531, %v531
        %v564 = vmul.f32 %v532, %v532
        %v565 = vmul.f32 %v533, %v533
        %v566 = vmul.f32 %v534, %v534
        %v567 = vmul.f32 %v535, %v535
        %v568 = vmul.f32 %v536, %v536
        %v569 = vmul.f32 %v537, %v537
        %v570 = vmul.f32 %v538, %v538
        %v571 = vmul.f32 %v539, %v539
        %v572 = vmul.f32 %v540, %v540
        %v573 = vmul.f32 %v541, %v541
        %v574 = vmul.f32 %v542, %v542
        %v575 = vmul.f32 %v543, %v543
        %v576 = vmul.f32 %v544, %v544
        %v577 = vmul.f32 %v545, %v545
        %v578 = vmul.f32 %v546, %v546
        %v579 = vmul.f32 %v547, %v547
        %v580 = vmul.f32 %v548, %v548
        %v581 = vmul.f32 %v549, %v549
        %v582 = vmul.f32 %v550, %v550
        %v583 = vmul.f32 %v551, %v551
        %v584 = vmul.f32 %v552, %v552
        %v585 = vmul.f32 %v553, %v553
        %v586 = vadd.f32 %v554, %v555
        %v587 = vadd.f32 %v586, %v556
        %v588 = vadd.f32 %v587, %v557
        %v589 = vadd.f32 %v588, %v558
        %v590 = vadd.f32 %v589, %v559
        %v591 = vadd.f32 %v590, %v560
        %v592 = vadd.f32 %v591, %v561
        %v593 = vadd.f32 %v592, %v562
        %v594 = vadd.f32 %v593, %v563
        %v595 = vadd.f32 %v594, %v564
        %v596 = vadd.f32 %v595, %v565
        %v597 = vadd.f32 %v596, %v566
        %v598 = vadd.f32 %v597, %v567
        %v599 = vadd.f32 %v598, %v568
        %v600 = vadd.f32 %v599, %v569
        %v601 = vadd.f32 %v600, %v570
        %v602 = vadd.f32 %v601, %v571
        %v603 = vadd.f32 %v602, %v572
        %v604 = vadd.f32 %v603, %v573
        %v605 = vadd.f32 %v604, %v574
        %v606 = vadd.f32 %v605, %v575
        %v607 = vadd.f32 %v606, %v576
        %v608 = vadd.f32 %v607, %v577
        %v609 = vadd.f32 %v608, %v578
        %v610 = vadd.f32 %v609, %v579
        %v611 = vadd.f32 %v610, %v580
        %v612 = vadd.f32 %v611, %v581
        %v613 = vadd.f32 %v612, %v582
        %v614 = vadd.f32 %v613, %v583
        %v615 = vadd.f32 %v614, %v584
        %v616 = vadd.f32 %v615, %v585
        %v617 = vrot.slane %v616, 4
        %v618 = vadd.f32 %v616, %v617
        %v619 = vrot.slane %v618, 2
        %v620 = vadd.f32 %v618, %v619
        %v621 = vrot.slane %v620, 1
        %v622 = vadd.f32 %v620, %v621
        %623 = vmatprep.subr.mxu0 0.0
        %624 = vmatpush1.xpose.msra.mxu0 %v369
        %625 = vmatprep.subr.mxu0 0.0
        %626 = vmatpush1.xpose.msra.mxu0 %v370
        %627 = vmatprep.subr.mxu0 0.0
        %628 = vmatpush1.xpose.msra.mxu0 %v371
        %629 = vmatprep.subr.mxu0 0.0
        %630 = vmatpush1.xpose.msra.mxu0 %v372
        %631 = vmatprep.subr.mxu0 0.0
        %632 = vmatpush1.xpose.msra.mxu0 0.0
        %633 = vmatprep.subr.mxu0 0.0
        %634 = vmatpush1.xpose.msra.mxu0 0.0
        %635 = vmatprep.subr.mxu0 0.0
        %636 = vmatpush1.xpose.msra.mxu0 0.0
        %637 = vmatprep.subr.mxu0 0.0
        %638 = vmatpush1.xpose.msra.mxu0 0.0
        %639 = vmatprep.subr.mxu0 0.0
        %640 = vmatpush1.xpose.msra.mxu0 0.0
        %641 = vmatprep.subr.mxu0 0.0
        %642 = vmatpush1.xpose.msra.mxu0 0.0
        %643 = vmatprep.subr.mxu0 0.0
        %644 = vmatpush1.xpose.msra.mxu0 0.0
        %645 = vmatprep.subr.mxu0 0.0
        %646 = vmatpush1.xpose.msra.mxu0 0.0
        %647 = vmatprep.subr.mxu0 0.0
        %648 = vmatpush1.xpose.msra.mxu0 0.0
        %649 = vmatprep.subr.mxu0 0.0
        %650 = vmatpush1.xpose.msra.mxu0 0.0
        %651 = vmatprep.subr.mxu0 0.0
        %652 = vmatpush1.xpose.msra.mxu0 0.0
        %653 = vmatprep.subr.mxu0 0.0
        %654 = vmatpush1.xpose.msra.mxu0 0.0
        %655 = vmatprep.subr.mxu0 0.0
        %656 = vmatpush1.xpose.msra.mxu0 0.0
        %657 = vmatprep.subr.mxu0 0.0
        %658 = vmatpush1.xpose.msra.mxu0 0.0
        %659 = vmatprep.subr.mxu0 0.0
        %660 = vmatpush1.xpose.msra.mxu0 0.0
        %661 = vmatprep.subr.mxu0 0.0
        %662 = vmatpush1.xpose.msra.mxu0 0.0
        %663 = vmatprep.subr.mxu0 0.0
        %664 = vmatpush1.xpose.msra.mxu0 0.0
        %665 = vmatprep.subr.mxu0 0.0
        %666 = vmatpush1.xpose.msra.mxu0 0.0
        %667 = vmatprep.subr.mxu0 0.0
        %668 = vmatpush1.xpose.msra.mxu0 0.0
        %669 = vmatprep.subr.mxu0 0.0
        %670 = vmatpush1.xpose.msra.mxu0 0.0
        %671 = vmatprep.subr.mxu0 0.0
        %672 = vmatpush1.xpose.msra.mxu0 0.0
        %673 = vmatprep.subr.mxu0 0.0
        %674 = vmatpush1.xpose.msra.mxu0 0.0
        %675 = vmatprep.subr.mxu0 0.0
        %676 = vmatpush1.xpose.msra.mxu0 0.0
        %677 = vmatprep.subr.mxu0 0.0
        %678 = vmatpush1.xpose.msra.mxu0 0.0
        %679 = vmatprep.subr.mxu0 0.0
        %680 = vmatpush1.xpose.msra.mxu0 0.0
        %681 = vmatprep.subr.mxu0 0.0
        %682 = vmatpush1.xpose.msra.mxu0 0.0
        %683 = vmatprep.subr.mxu0 0.0
        %684 = vmatpush1.xpose.msra.mxu0 0.0
        %685 = vmatprep.subr.mxu0 0.0
        %686 = vmatpush1.xpose.msra.mxu0 0.0
        %687 = vmatprep.mubr.f32.mxu0 0.0
        %688 = vmatmul.mubr.f32.gmra.mrb[0].mxu0 %v622
        %v689 = vpop.f32.mrb[0].mxu0
        %v690 = vadd.f32 0.0, %v689
        %v691 = vpop.f32.mrb[0].mxu0
        %692 = vdwg.mxu0
        %v693 = vmul.f32 %v690, 0.0009765625
        %v695 = vsel %vm444, %v693, 0
        %697 = vmatprep.subr.mxu0 0.0
        %698 = vmatpush1.msra.mxu0 %v369
        %699 = vmatprep.subr.mxu0 0.0
        %700 = vmatpush1.msra.mxu0 %v370
        %701 = vmatprep.subr.mxu0 0.0
        %702 = vmatpush1.msra.mxu0 %v371
        %703 = vmatprep.subr.mxu0 0.0
        %704 = vmatpush1.msra.mxu0 %v372
        %705 = vmatprep.subr.mxu0 0.0
        %706 = vmatpush1.msra.mxu0 0.0
        %707 = vmatprep.subr.mxu0 0.0
        %708 = vmatpush1.msra.mxu0 0.0
        %709 = vmatprep.subr.mxu0 0.0
        %710 = vmatpush1.msra.mxu0 0.0
        %711 = vmatprep.subr.mxu0 0.0
        %712 = vmatpush1.msra.mxu0 0.0
        %713 = vmatprep.subr.mxu0 0.0
        %714 = vmatpush1.msra.mxu0 0.0
        %715 = vmatprep.subr.mxu0 0.0
        %716 = vmatpush1.msra.mxu0 0.0
        %717 = vmatprep.subr.mxu0 0.0
        %718 = vmatpush1.msra.mxu0 0.0
        %719 = vmatprep.subr.mxu0 0.0
        %720 = vmatpush1.msra.mxu0 0.0
        %721 = vmatprep.subr.mxu0 0.0
        %722 = vmatpush1.msra.mxu0 0.0
        %723 = vmatprep.subr.mxu0 0.0
        %724 = vmatpush1.msra.mxu0 0.0
        %725 = vmatprep.subr.mxu0 0.0
        %726 = vmatpush1.msra.mxu0 0.0
        %727 = vmatprep.subr.mxu0 0.0
        %728 = vmatpush1.msra.mxu0 0.0
        %729 = vmatprep.subr.mxu0 0.0
        %730 = vmatpush1.msra.mxu0 0.0
        %731 = vmatprep.subr.mxu0 0.0
        %732 = vmatpush1.msra.mxu0 0.0
        %733 = vmatprep.subr.mxu0 0.0
        %734 = vmatpush1.msra.mxu0 0.0
        %735 = vmatprep.subr.mxu0 0.0
        %736 = vmatpush1.msra.mxu0 0.0
        %737 = vmatprep.subr.mxu0 0.0
        %738 = vmatpush1.msra.mxu0 0.0
        %739 = vmatprep.subr.mxu0 0.0
        %740 = vmatpush1.msra.mxu0 0.0
        %741 = vmatprep.subr.mxu0 0.0
        %742 = vmatpush1.msra.mxu0 0.0
        %743 = vmatprep.subr.mxu0 0.0
        %744 = vmatpush1.msra.mxu0 0.0
        %745 = vmatprep.subr.mxu0 0.0
        %746 = vmatpush1.msra.mxu0 0.0
        %747 = vmatprep.subr.mxu0 0.0
        %748 = vmatpush1.msra.mxu0 0.0
        %749 = vmatprep.subr.mxu0 0.0
        %750 = vmatpush1.msra.mxu0 0.0
        %751 = vmatprep.subr.mxu0 0.0
        %752 = vmatpush1.msra.mxu0 0.0
        %753 = vmatprep.subr.mxu0 0.0
        %754 = vmatpush1.msra.mxu0 0.0
        %755 = vmatprep.subr.mxu0 0.0
        %756 = vmatpush1.msra.mxu0 0.0
        %757 = vmatprep.subr.mxu0 0.0
        %758 = vmatpush1.msra.mxu0 0.0
        %759 = vmatprep.subr.mxu0 0.0
        %760 = vmatpush1.msra.mxu0 0.0
        %761 = vmatprep.mubr.f32.mxu0 0.0
        %762 = vmatmul.mubr.f32.gmra.mrb[0].mxu0 %v695
        %v763 = vpop.f32.mrb[0].mxu0
        %v764 = vadd.f32 1e-06, %v763
        %v765 = vpop.f32.mrb[0].mxu0
        %766 = vdwg.mxu0
        %v767 = vrsqrt.pop %v764
        %v768 = vld [vmem:[%s1] sm:$0x1]
        %v769 = vmul.f32 %v767, %v768
        %v770 = vlaneseq
        %v771 = vshrl.u32 %v770, 7
        %v772 = vsub.s32 0, %v771
        %v773 = vrot.slane %v769, %v772
        %v774 = vmul.f32 %v522, %v773
        %v775 = vmul.f32 %v523, %v773
        %v776 = vmul.f32 %v524, %v773
        %v777 = vmul.f32 %v525, %v773
        %v778 = vmul.f32 %v526, %v773
        %v779 = vmul.f32 %v527, %v773
        %v780 = vmul.f32 %v528, %v773
        %v781 = vmul.f32 %v529, %v773
        %v782 = vmul.f32 %v530, %v773
        %v783 = vmul.f32 %v531, %v773
        %v784 = vmul.f32 %v532, %v773
        %v785 = vmul.f32 %v533, %v773
        %v786 = vmul.f32 %v534, %v773
        %v787 = vmul.f32 %v535, %v773
        %v788 = vmul.f32 %v536, %v773
        %v789 = vmul.f32 %v537, %v773
        %v790 = vmul.f32 %v538, %v773
        %v791 = vmul.f32 %v539, %v773
        %v792 = vmul.f32 %v540, %v773
        %v793 = vmul.f32 %v541, %v773
        %v794 = vmul.f32 %v542, %v773
        %v795 = vmul.f32 %v543, %v773
        %v796 = vmul.f32 %v544, %v773
        %v797 = vmul.f32 %v545, %v773
        %v798 = vmul.f32 %v546, %v773
        %v799 = vmul.f32 %v547, %v773
        %v800 = vmul.f32 %v548, %v773
        %v801 = vmul.f32 %v549, %v773
        %v802 = vmul.f32 %v550, %v773
        %v803 = vmul.f32 %v551, %v773
        %v804 = vmul.f32 %v552, %v773
        %v805 = vmul.f32 %v553, %v773
        %v806 = vld [vmem:[%s2] sm:$0x1]
        %v808 = vlaneseq
        %v809 = vshrl.u32 %v808, 7
        %v810 = vsub.s32 0, %v809
        %v811 = vrot.slane %v806, %v810
        %v813 = vadd.f32 %v774, %v811
        %v814 = vadd.f32 %v775, %v811
        %v815 = vadd.f32 %v776, %v811
        %v816 = vadd.f32 %v777, %v811
        %v817 = vadd.f32 %v778, %v811
        %v818 = vadd.f32 %v779, %v811
        %v819 = vadd.f32 %v780, %v811
        %v820 = vadd.f32 %v781, %v811
        %v821 = vadd.f32 %v782, %v811
        %v822 = vadd.f32 %v783, %v811
        %v823 = vadd.f32 %v784, %v811
        %v824 = vadd.f32 %v785, %v811
        %v825 = vadd.f32 %v786, %v811
        %v826 = vadd.f32 %v787, %v811
        %v827 = vadd.f32 %v788, %v811
        %v828 = vadd.f32 %v789, %v811
        %v829 = vadd.f32 %v790, %v811
        %v830 = vadd.f32 %v791, %v811
        %v831 = vadd.f32 %v792, %v811
        %v832 = vadd.f32 %v793, %v811
        %v833 = vadd.f32 %v794, %v811
        %v834 = vadd.f32 %v795, %v811
        %v835 = vadd.f32 %v796, %v811
        %v836 = vadd.f32 %v797, %v811
        %v837 = vadd.f32 %v798, %v811
        %v838 = vadd.f32 %v799, %v811
        %v839 = vadd.f32 %v800, %v811
        %v840 = vadd.f32 %v801, %v811
        %v841 = vadd.f32 %v802, %v811
        %v842 = vadd.f32 %v803, %v811
        %v843 = vadd.f32 %v804, %v811
        %v844 = vadd.f32 %v805, %v811
        %v845 = vpack.c.bf16 %v814, %v813
        %v846 = vpack.c.bf16 %v816, %v815
        %v847 = vpack.c.bf16 %v818, %v817
        %v848 = vpack.c.bf16 %v820, %v819
        %v849 = vpack.c.bf16 %v822, %v821
        %v850 = vpack.c.bf16 %v824, %v823
        %v851 = vpack.c.bf16 %v826, %v825
        %v852 = vpack.c.bf16 %v828, %v827
        %v853 = vpack.c.bf16 %v830, %v829
        %v854 = vpack.c.bf16 %v832, %v831
        %v855 = vpack.c.bf16 %v834, %v833
        %v856 = vpack.c.bf16 %v836, %v835
        %v857 = vpack.c.bf16 %v838, %v837
        %v858 = vpack.c.bf16 %v840, %v839
        %v859 = vpack.c.bf16 %v842, %v841
        %v860 = vpack.c.bf16 %v844, %v843
        %v861 = vld [vmem:[#allocation7] sm:$0xff]
        %v862 = vld [vmem:[#allocation7 + $0x8] sm:$0xf]
        %v863 = vld [vmem:[#allocation7 + $0xc] sm:$0xff]
        %v864 = vld [vmem:[#allocation7 + $0x14] sm:$0xf]
        %v865 = vld [vmem:[#allocation7 + $0x18] sm:$0xff]
        %v866 = vld [vmem:[#allocation7 + $0x20] sm:$0xf]
        %v867 = vld [vmem:[#allocation7 + $0x24] sm:$0xff]
        %v868 = vld [vmem:[#allocation7 + $0x2c] sm:$0xf]
        %v869 = vld [vmem:[#allocation7 + $0x30] sm:$0xff]
        %v870 = vld [vmem:[#allocation7 + $0x38] sm:$0xf]
        %v871 = vld [vmem:[#allocation7 + $0x3c] sm:$0xff]
        %v872 = vld [vmem:[#allocation7 + $0x44] sm:$0xf]
        %v873 = vld [vmem:[#allocation7 + $0x48] sm:$0xff]
        %v874 = vld [vmem:[#allocation7 + $0x50] sm:$0xf]
        %v875 = vld [vmem:[#allocation7 + $0x54] sm:$0xff]
        %v876 = vld [vmem:[#allocation7 + $0x5c] sm:$0xf]
        %v877 = vld [vmem:[#allocation7 + $0x60] sm:$0xff]
        %v878 = vld [vmem:[#allocation7 + $0x68] sm:$0xf]
        %v879 = vld [vmem:[#allocation7 + $0x6c] sm:$0xff]
        %v880 = vld [vmem:[#allocation7 + $0x74] sm:$0xf]
        %v881 = vld [vmem:[#allocation7 + $0x78] sm:$0xff]
        %v882 = vld [vmem:[#allocation7 + $0x80] sm:$0xf]
        %v883 = vld [vmem:[#allocation7 + $0x84] sm:$0xff]
        %v884 = vld [vmem:[#allocation7 + $0x8c] sm:$0xf]
        %v885 = vld [vmem:[#allocation7 + $0x90] sm:$0xff]
        %v886 = vld [vmem:[#allocation7 + $0x98] sm:$0xf]
        %v887 = vld [vmem:[#allocation7 + $0x9c] sm:$0xff]
        %v888 = vld [vmem:[#allocation7 + $0xa4] sm:$0xf]
        %v889 = vld [vmem:[#allocation7 + $0xa8] sm:$0xff]
        %v890 = vld [vmem:[#allocation7 + $0xb0] sm:$0xf]
        %v891 = vld [vmem:[#allocation7 + $0xb4] sm:$0xff]
        %v892 = vld [vmem:[#allocation7 + $0xbc] sm:$0xf]
        %v893 = vld [vmem:[%s5] sm:$0x7]
        %v895 = vlaneseq
        %v896 = vshrl.u32 %v895, 7
        %v897 = vsub.s32 0, %v896
        %v898 = vrot.slane %v893, %v897
        %v899 = vlaneseq
        %v900 = vshrl.u32 %v899, 7
        %v901 = vsub.s32 1, %v900
        %v902 = vrot.slane %v893, %v901
        %v903 = vlaneseq
        %v904 = vshrl.u32 %v903, 7
        %v905 = vsub.s32 2, %v904
        %v906 = vrot.slane %v893, %v905
        %v942 = vunpack.c.l.b16 %v861
        %v943 = vunpack.c.h.b16 %v861
        %v944 = vunpack.c.l.b16 %v862
        %v945 = vunpack.c.l.b16 %v863
        %v946 = vunpack.c.h.b16 %v863
        %v947 = vunpack.c.l.b16 %v864
        %v948 = vunpack.c.l.b16 %v865
        %v949 = vunpack.c.h.b16 %v865
        %v950 = vunpack.c.l.b16 %v866
        %v951 = vunpack.c.l.b16 %v867
        %v952 = vunpack.c.h.b16 %v867
        %v953 = vunpack.c.l.b16 %v868
        %v954 = vunpack.c.l.b16 %v869
        %v955 = vunpack.c.h.b16 %v869
        %v956 = vunpack.c.l.b16 %v870
        %v957 = vunpack.c.l.b16 %v871
        %v958 = vunpack.c.h.b16 %v871
        %v959 = vunpack.c.l.b16 %v872
        %v960 = vunpack.c.l.b16 %v873
        %v961 = vunpack.c.h.b16 %v873
        %v962 = vunpack.c.l.b16 %v874
        %v963 = vunpack.c.l.b16 %v875
        %v964 = vunpack.c.h.b16 %v875
        %v965 = vunpack.c.l.b16 %v876
        %v966 = vunpack.c.l.b16 %v877
        %v967 = vunpack.c.h.b16 %v877
        %v968 = vunpack.c.l.b16 %v878
        %v969 = vunpack.c.l.b16 %v879
        %v970 = vunpack.c.h.b16 %v879
        %v971 = vunpack.c.l.b16 %v880
        %v972 = vunpack.c.l.b16 %v881
        %v973 = vunpack.c.h.b16 %v881
        %v974 = vunpack.c.l.b16 %v882
        %v975 = vunpack.c.l.b16 %v883
        %v976 = vunpack.c.h.b16 %v883
        %v977 = vunpack.c.l.b16 %v884
        %v978 = vunpack.c.l.b16 %v885
        %v979 = vunpack.c.h.b16 %v885
        %v980 = vunpack.c.l.b16 %v886
        %v981 = vunpack.c.l.b16 %v887
        %v982 = vunpack.c.h.b16 %v887
        %v983 = vunpack.c.l.b16 %v888
        %v984 = vunpack.c.l.b16 %v889
        %v985 = vunpack.c.h.b16 %v889
        %v986 = vunpack.c.l.b16 %v890
        %v987 = vunpack.c.l.b16 %v891
        %v988 = vunpack.c.h.b16 %v891
        %v989 = vunpack.c.l.b16 %v892
        %v990 = vpack.c.b16 %v945, %v942
        %v991 = vpack.c.b16 %v946, %v943
        %v992 = vpack.c.b16 %v947, %v944
        %v993 = vpack.c.b16 %v951, %v948
        %v994 = vpack.c.b16 %v952, %v949
        %v995 = vpack.c.b16 %v953, %v950
        %v996 = vpack.c.b16 %v957, %v954
        %v997 = vpack.c.b16 %v958, %v955
        %v998 = vpack.c.b16 %v959, %v956
        %v999 = vpack.c.b16 %v963, %v960
        %v1000 = vpack.c.b16 %v964, %v961
        %v1001 = vpack.c.b16 %v965, %v962
        %v1002 = vpack.c.b16 %v969, %v966
        %v1003 = vpack.c.b16 %v970, %v967
        %v1004 = vpack.c.b16 %v971, %v968
        %v1005 = vpack.c.b16 %v975, %v972
        %v1006 = vpack.c.b16 %v976, %v973
        %v1007 = vpack.c.b16 %v977, %v974
        %v1008 = vpack.c.b16 %v981, %v978
        %v1009 = vpack.c.b16 %v982, %v979
        %v1010 = vpack.c.b16 %v983, %v980
        %v1011 = vpack.c.b16 %v987, %v984
        %v1012 = vpack.c.b16 %v988, %v985
        %v1013 = vpack.c.b16 %v989, %v986
        %1038 = vmatprep.subr.bf16.mxu0 %v991
        %1039 = vmatpush1.bf16.msra.mxu0 %v990
        %1040 = vmatprep.subr.bf16.mxu0 %v994
        %1041 = vmatpush1.bf16.msra.mxu0 %v993
        %1042 = vmatprep.subr.bf16.mxu0 %v997
        %1043 = vmatpush1.bf16.msra.mxu0 %v996
        %1044 = vmatprep.subr.bf16.mxu0 %v1000
        %1045 = vmatpush1.bf16.msra.mxu0 %v999
        %1046 = vmatprep.subr.bf16.mxu0 %v1003
        %1047 = vmatpush1.bf16.msra.mxu0 %v1002
        %1048 = vmatprep.subr.bf16.mxu0 %v1006
        %1049 = vmatpush1.bf16.msra.mxu0 %v1005
        %1050 = vmatprep.subr.bf16.mxu0 %v1009
        %1051 = vmatpush1.bf16.msra.mxu0 %v1008
        %1052 = vmatprep.subr.bf16.mxu0 %v1012
        %1053 = vmatpush1.bf16.msra.mxu0 %v1011
        %1054 = vmatprep.subr.bf16.mxu0 0
        %1055 = vmatpush1.bf16.msra.mxu0 0
        %1056 = vmatprep.subr.bf16.mxu0 0
        %1057 = vmatpush1.bf16.msra.mxu0 0
        %1058 = vmatprep.subr.bf16.mxu0 0
        %1059 = vmatpush1.bf16.msra.mxu0 0
        %1060 = vmatprep.subr.bf16.mxu0 0
        %1061 = vmatpush1.bf16.msra.mxu0 0
        %1062 = vmatprep.subr.bf16.mxu0 0
        %1063 = vmatpush1.bf16.msra.mxu0 0
        %1064 = vmatprep.subr.bf16.mxu0 0
        %1065 = vmatpush1.bf16.msra.mxu0 0
        %1066 = vmatprep.subr.bf16.mxu0 0
        %1067 = vmatpush1.bf16.msra.mxu0 0
        %1068 = vmatprep.subr.bf16.mxu0 0
        %1069 = vmatpush1.bf16.msra.mxu0 0
        %1070 = vmatprep.mubr.bf16.mxu0 0
        %1071 = vmatmul.mubr.bf16.gmra.mrb[0].mxu0 %v845
        %v1072 = vpop.f32.mrb[0].mxu0
        %v1073 = vadd.f32 %v898, %v1072
        %v1074 = vpop.f32.mrb[0].mxu0
        %v1075 = vadd.f32 %v902, %v1074
        %v1076 = vpop.f32.mrb[0].mxu0
        %v1077 = vadd.f32 %v898, %v1076
        %v1078 = vpop.f32.mrb[0].mxu0
        %v1079 = vadd.f32 %v902, %v1078
        %1080 = vmatprep.mubr.bf16.mxu0 0
        %1081 = vmatmul.mubr.bf16.gmra.mrb[0].mxu0 %v846
        %v1082 = vpop.f32.mrb[0].mxu0
        %v1083 = vadd.f32 %v898, %v1082
        %v1084 = vpop.f32.mrb[0].mxu0
        %v1085 = vadd.f32 %v902, %v1084
        %v1086 = vpop.f32.mrb[0].mxu0
        %v1087 = vadd.f32 %v898, %v1086
        %v1088 = vpop.f32.mrb[0].mxu0
        %v1089 = vadd.f32 %v902, %v1088
        %1090 = vmatprep.mubr.bf16.mxu0 0
        %1091 = vmatmul.mubr.bf16.gmra.mrb[0].mxu0 %v847
        %v1092 = vpop.f32.mrb[0].mxu0
        %v1093 = vadd.f32 %v898, %v1092
        %v1094 = vpop.f32.mrb[0].mxu0
        %v1095 = vadd.f32 %v902, %v1094
        %v1096 = vpop.f32.mrb[0].mxu0
        %v1097 = vadd.f32 %v898, %v1096
        %v1098 = vpop.f32.mrb[0].mxu0
        %v1099 = vadd.f32 %v902, %v1098
        %1100 = vmatprep.mubr.bf16.mxu0 0
        %1101 = vmatmul.mubr.bf16.gmra.mrb[0].mxu0 %v848
        %v1102 = vpop.f32.mrb[0].mxu0
        %v1103 = vadd.f32 %v898, %v1102
        %v1104 = vpop.f32.mrb[0].mxu0
        %v1105 = vadd.f32 %v902, %v1104
        %v1106 = vpop.f32.mrb[0].mxu0
        %v1107 = vadd.f32 %v898, %v1106
        %v1108 = vpop.f32.mrb[0].mxu0
        %v1109 = vadd.f32 %v902, %v1108
        %1110 = vmatprep.mubr.bf16.mxu0 0
        %1111 = vmatmul.mubr.bf16.gmra.mrb[0].mxu0 %v849
        %v1112 = vpop.f32.mrb[0].mxu0
        %v1113 = vadd.f32 %v898, %v1112
        %v1114 = vpop.f32.mrb[0].mxu0
        %v1115 = vadd.f32 %v902, %v1114
        %v1116 = vpop.f32.mrb[0].mxu0
        %v1117 = vadd.f32 %v898, %v1116
        %v1118 = vpop.f32.mrb[0].mxu0
        %v1119 = vadd.f32 %v902, %v1118
        %1120 = vmatprep.mubr.bf16.mxu0 0
        %1121 = vmatmul.mubr.bf16.gmra.mrb[0].mxu0 %v850
        %v1122 = vpop.f32.mrb[0].mxu0
        %v1123 = vadd.f32 %v898, %v1122
        %v1124 = vpop.f32.mrb[0].mxu0
        %v1125 = vadd.f32 %v902, %v1124
        %v1126 = vpop.f32.mrb[0].mxu0
        %v1127 = vadd.f32 %v898, %v1126
        %v1128 = vpop.f32.mrb[0].mxu0
        %v1129 = vadd.f32 %v902, %v1128
        %1130 = vmatprep.mubr.bf16.mxu0 0
        %1131 = vmatmul.mubr.bf16.gmra.mrb[0].mxu0 %v851
        %v1132 = vpop.f32.mrb[0].mxu0
        %v1133 = vadd.f32 %v898, %v1132
        %v1134 = vpop.f32.mrb[0].mxu0
        %v1135 = vadd.f32 %v902, %v1134
        %v1136 = vpop.f32.mrb[0].mxu0
        %v1137 = vadd.f32 %v898, %v1136
        %v1138 = vpop.f32.mrb[0].mxu0
        %v1139 = vadd.f32 %v902, %v1138
        %1140 = vmatprep.mubr.bf16.mxu0 0
        %1141 = vmatmul.mubr.bf16.gmra.mrb[0].mxu0 %v852
        %v1142 = vpop.f32.mrb[0].mxu0
        %v1143 = vadd.f32 %v898, %v1142
        %v1144 = vpop.f32.mrb[0].mxu0
        %v1145 = vadd.f32 %v902, %v1144
        %v1146 = vpop.f32.mrb[0].mxu0
        %v1147 = vadd.f32 %v898, %v1146
        %v1148 = vpop.f32.mrb[0].mxu0
        %v1149 = vadd.f32 %v902, %v1148
        %1150 = vmatprep.mubr.bf16.mxu0 0
        %1151 = vmatmul.mubr.bf16.gmra.mrb[0].mxu0 %v853
        %v1152 = vpop.f32.mrb[0].mxu0
        %v1153 = vadd.f32 %v898, %v1152
        %v1154 = vpop.f32.mrb[0].mxu0
        %v1155 = vadd.f32 %v902, %v1154
        %v1156 = vpop.f32.mrb[0].mxu0
        %v1157 = vadd.f32 %v898, %v1156
        %v1158 = vpop.f32.mrb[0].mxu0
        %v1159 = vadd.f32 %v902, %v1158
        %1160 = vmatprep.mubr.bf16.mxu0 0
        %1161 = vmatmul.mubr.bf16.gmra.mrb[0].mxu0 %v854
        %v1162 = vpop.f32.mrb[0].mxu0
        %v1163 = vadd.f32 %v898, %v1162
        %v1164 = vpop.f32.mrb[0].mxu0
        %v1165 = vadd.f32 %v902, %v1164
        %v1166 = vpop.f32.mrb[0].mxu0
        %v1167 = vadd.f32 %v898, %v1166
        %v1168 = vpop.f32.mrb[0].mxu0
        %v1169 = vadd.f32 %v902, %v1168
        %1170 = vmatprep.mubr.bf16.mxu0 0
        %1171 = vmatmul.mubr.bf16.gmra.mrb[0].mxu0 %v855
        %v1172 = vpop.f32.mrb[0].mxu0
        %v1173 = vadd.f32 %v898, %v1172
        %v1174 = vpop.f32.mrb[0].mxu0
        %v1175 = vadd.f32 %v902, %v1174
        %v1176 = vpop.f32.mrb[0].mxu0
        %v1177 = vadd.f32 %v898, %v1176
        %v1178 = vpop.f32.mrb[0].mxu0
        %v1179 = vadd.f32 %v902, %v1178
        %1180 = vmatprep.mubr.bf16.mxu0 0
        %1181 = vmatmul.mubr.bf16.gmra.mrb[0].mxu0 %v856
        %v1182 = vpop.f32.mrb[0].mxu0
        %v1183 = vadd.f32 %v898, %v1182
        %v1184 = vpop.f32.mrb[0].mxu0
        %v1185 = vadd.f32 %v902, %v1184
        %v1186 = vpop.f32.mrb[0].mxu0
        %v1187 = vadd.f32 %v898, %v1186
        %v1188 = vpop.f32.mrb[0].mxu0
        %v1189 = vadd.f32 %v902, %v1188
        %1190 = vmatprep.mubr.bf16.mxu0 0
        %1191 = vmatmul.mubr.bf16.gmra.mrb[0].mxu0 %v857
        %v1192 = vpop.f32.mrb[0].mxu0
        %v1193 = vadd.f32 %v898, %v1192
        %v1194 = vpop.f32.mrb[0].mxu0
        %v1195 = vadd.f32 %v902, %v1194
        %v1196 = vpop.f32.mrb[0].mxu0
        %v1197 = vadd.f32 %v898, %v1196
        %v1198 = vpop.f32.mrb[0].mxu0
        %v1199 = vadd.f32 %v902, %v1198
        %1200 = vmatprep.mubr.bf16.mxu0 0
        %1201 = vmatmul.mubr.bf16.gmra.mrb[0].mxu0 %v858
        %v1202 = vpop.f32.mrb[0].mxu0
        %v1203 = vadd.f32 %v898, %v1202
        %v1204 = vpop.f32.mrb[0].mxu0
        %v1205 = vadd.f32 %v902, %v1204
        %v1206 = vpop.f32.mrb[0].mxu0
        %v1207 = vadd.f32 %v898, %v1206
        %v1208 = vpop.f32.mrb[0].mxu0
        %v1209 = vadd.f32 %v902, %v1208
        %1210 = vmatprep.mubr.bf16.mxu0 0
        %1211 = vmatmul.mubr.bf16.gmra.mrb[0].mxu0 %v859
        %v1212 = vpop.f32.mrb[0].mxu0
        %v1213 = vadd.f32 %v898, %v1212
        %v1214 = vpop.f32.mrb[0].mxu0
        %v1215 = vadd.f32 %v902, %v1214
        %v1216 = vpop.f32.mrb[0].mxu0
        %v1217 = vadd.f32 %v898, %v1216
        %v1218 = vpop.f32.mrb[0].mxu0
        %v1219 = vadd.f32 %v902, %v1218
        %1220 = vmatprep.mubr.bf16.mxu0 0
        %1221 = vmatmul.mubr.bf16.gmra.mrb[0].mxu0 %v860
        %v1222 = vpop.f32.mrb[0].mxu0
        %v1223 = vadd.f32 %v898, %v1222
        %v1224 = vpop.f32.mrb[0].mxu0
        %v1225 = vadd.f32 %v902, %v1224
        %v1226 = vpop.f32.mrb[0].mxu0
        %v1227 = vadd.f32 %v898, %v1226
        %v1228 = vpop.f32.mrb[0].mxu0
        %v1229 = vadd.f32 %v902, %v1228
        %1230 = vdwg.mxu0
        %1231 = vmatprep.subr.bf16.mxu0 0
        %1232 = vmatpush1.bf16.msra.mxu0 %v992
        %1233 = vmatprep.subr.bf16.mxu0 0
        %1234 = vmatpush1.bf16.msra.mxu0 %v995
        %1235 = vmatprep.subr.bf16.mxu0 0
        %1236 = vmatpush1.bf16.msra.mxu0 %v998
        %1237 = vmatprep.subr.bf16.mxu0 0
        %1238 = vmatpush1.bf16.msra.mxu0 %v1001
        %1239 = vmatprep.subr.bf16.mxu0 0
        %1240 = vmatpush1.bf16.msra.mxu0 %v1004
        %1241 = vmatprep.subr.bf16.mxu0 0
        %1242 = vmatpush1.bf16.msra.mxu0 %v1007
        %1243 = vmatprep.subr.bf16.mxu0 0
        %1244 = vmatpush1.bf16.msra.mxu0 %v1010
        %1245 = vmatprep.subr.bf16.mxu0 0
        %1246 = vmatpush1.bf16.msra.mxu0 %v1013
        %1247 = vmatprep.subr.bf16.mxu0 0
        %1248 = vmatpush1.bf16.msra.mxu0 0
        %1249 = vmatprep.subr.bf16.mxu0 0
        %1250 = vmatpush1.bf16.msra.mxu0 0
        %1251 = vmatprep.subr.bf16.mxu0 0
        %1252 = vmatpush1.bf16.msra.mxu0 0
        %1253 = vmatprep.subr.bf16.mxu0 0
        %1254 = vmatpush1.bf16.msra.mxu0 0
        %1255 = vmatprep.subr.bf16.mxu0 0
        %1256 = vmatpush1.bf16.msra.mxu0 0
        %1257 = vmatprep.subr.bf16.mxu0 0
        %1258 = vmatpush1.bf16.msra.mxu0 0
        %1259 = vmatprep.subr.bf16.mxu0 0
        %1260 = vmatpush1.bf16.msra.mxu0 0
        %1261 = vmatprep.subr.bf16.mxu0 0
        %1262 = vmatpush1.bf16.msra.mxu0 0
        %1263 = vmatprep.mubr.bf16.mxu0 0
        %1264 = vmatmul.mubr.bf16.gmra.mrb[0].mxu0 %v845
        %v1265 = vpop.f32.mrb[0].mxu0
        %v1266 = vadd.f32 %v906, %v1265
        %v1267 = vpop.f32.mrb[0].mxu0
        %v1268 = vpop.f32.mrb[0].mxu0
        %v1269 = vadd.f32 %v906, %v1268
        %v1270 = vpop.f32.mrb[0].mxu0
        %1271 = vmatprep.mubr.bf16.mxu0 0
        %1272 = vmatmul.mubr.bf16.gmra.mrb[0].mxu0 %v846
        %v1273 = vpop.f32.mrb[0].mxu0
        %v1274 = vadd.f32 %v906, %v1273
        %v1275 = vpop.f32.mrb[0].mxu0
        %v1276 = vpop.f32.mrb[0].mxu0
        %v1277 = vadd.f32 %v906, %v1276
        %v1278 = vpop.f32.mrb[0].mxu0
        %1279 = vmatprep.mubr.bf16.mxu0 0
        %1280 = vmatmul.mubr.bf16.gmra.mrb[0].mxu0 %v847
        %v1281 = vpop.f32.mrb[0].mxu0
        %v1282 = vadd.f32 %v906, %v1281
        %v1283 = vpop.f32.mrb[0].mxu0
        %v1284 = vpop.f32.mrb[0].mxu0
        %v1285 = vadd.f32 %v906, %v1284
        %v1286 = vpop.f32.mrb[0].mxu0
        %1287 = vmatprep.mubr.bf16.mxu0 0
        %1288 = vmatmul.mubr.bf16.gmra.mrb[0].mxu0 %v848
        %v1289 = vpop.f32.mrb[0].mxu0
        %v1290 = vadd.f32 %v906, %v1289
        %v1291 = vpop.f32.mrb[0].mxu0
        %v1292 = vpop.f32.mrb[0].mxu0
        %v1293 = vadd.f32 %v906, %v1292
        %v1294 = vpop.f32.mrb[0].mxu0
        %1295 = vmatprep.mubr.bf16.mxu0 0
        %1296 = vmatmul.mubr.bf16.gmra.mrb[0].mxu0 %v849
        %v1297 = vpop.f32.mrb[0].mxu0
        %v1298 = vadd.f32 %v906, %v1297
        %v1299 = vpop.f32.mrb[0].mxu0
        %v1300 = vpop.f32.mrb[0].mxu0
        %v1301 = vadd.f32 %v906, %v1300
        %v1302 = vpop.f32.mrb[0].mxu0
        %1303 = vmatprep.mubr.bf16.mxu0 0
        %1304 = vmatmul.mubr.bf16.gmra.mrb[0].mxu0 %v850
        %v1305 = vpop.f32.mrb[0].mxu0
        %v1306 = vadd.f32 %v906, %v1305
        %v1307 = vpop.f32.mrb[0].mxu0
        %v1308 = vpop.f32.mrb[0].mxu0
        %v1309 = vadd.f32 %v906, %v1308
        %v1310 = vpop.f32.mrb[0].mxu0
        %1311 = vmatprep.mubr.bf16.mxu0 0
        %1312 = vmatmul.mubr.bf16.gmra.mrb[0].mxu0 %v851
        %v1313 = vpop.f32.mrb[0].mxu0
        %v1314 = vadd.f32 %v906, %v1313
        %v1315 = vpop.f32.mrb[0].mxu0
        %v1316 = vpop.f32.mrb[0].mxu0
        %v1317 = vadd.f32 %v906, %v1316
        %v1318 = vpop.f32.mrb[0].mxu0
        %1319 = vmatprep.mubr.bf16.mxu0 0
        %1320 = vmatmul.mubr.bf16.gmra.mrb[0].mxu0 %v852
        %v1321 = vpop.f32.mrb[0].mxu0
        %v1322 = vadd.f32 %v906, %v1321
        %v1323 = vpop.f32.mrb[0].mxu0
        %v1324 = vpop.f32.mrb[0].mxu0
        %v1325 = vadd.f32 %v906, %v1324
        %v1326 = vpop.f32.mrb[0].mxu0
        %1327 = vmatprep.mubr.bf16.mxu0 0
        %1328 = vmatmul.mubr.bf16.gmra.mrb[0].mxu0 %v853
        %v1329 = vpop.f32.mrb[0].mxu0
        %v1330 = vadd.f32 %v906, %v1329
        %v1331 = vpop.f32.mrb[0].mxu0
        %v1332 = vpop.f32.mrb[0].mxu0
        %v1333 = vadd.f32 %v906, %v1332
        %v1334 = vpop.f32.mrb[0].mxu0
        %1335 = vmatprep.mubr.bf16.mxu0 0
        %1336 = vmatmul.mubr.bf16.gmra.mrb[0].mxu0 %v854
        %v1337 = vpop.f32.mrb[0].mxu0
        %v1338 = vadd.f32 %v906, %v1337
        %v1339 = vpop.f32.mrb[0].mxu0
        %v1340 = vpop.f32.mrb[0].mxu0
        %v1341 = vadd.f32 %v906, %v1340
        %v1342 = vpop.f32.mrb[0].mxu0
        %1343 = vmatprep.mubr.bf16.mxu0 0
        %1344 = vmatmul.mubr.bf16.gmra.mrb[0].mxu0 %v855
        %v1345 = vpop.f32.mrb[0].mxu0
        %v1346 = vadd.f32 %v906, %v1345
        %v1347 = vpop.f32.mrb[0].mxu0
        %v1348 = vpop.f32.mrb[0].mxu0
        %v1349 = vadd.f32 %v906, %v1348
        %v1350 = vpop.f32.mrb[0].mxu0
        %1351 = vmatprep.mubr.bf16.mxu0 0
        %1352 = vmatmul.mubr.bf16.gmra.mrb[0].mxu0 %v856
        %v1353 = vpop.f32.mrb[0].mxu0
        %v1354 = vadd.f32 %v906, %v1353
        %v1355 = vpop.f32.mrb[0].mxu0
        %v1356 = vpop.f32.mrb[0].mxu0
        %v1357 = vadd.f32 %v906, %v1356
        %v1358 = vpop.f32.mrb[0].mxu0
        %1359 = vmatprep.mubr.bf16.mxu0 0
        %1360 = vmatmul.mubr.bf16.gmra.mrb[0].mxu0 %v857
        %v1361 = vpop.f32.mrb[0].mxu0
        %v1362 = vadd.f32 %v906, %v1361
        %v1363 = vpop.f32.mrb[0].mxu0
        %v1364 = vpop.f32.mrb[0].mxu0
        %v1365 = vadd.f32 %v906, %v1364
        %v1366 = vpop.f32.mrb[0].mxu0
        %1367 = vmatprep.mubr.bf16.mxu0 0
        %1368 = vmatmul.mubr.bf16.gmra.mrb[0].mxu0 %v858
        %v1369 = vpop.f32.mrb[0].mxu0
        %v1370 = vadd.f32 %v906, %v1369
        %v1371 = vpop.f32.mrb[0].mxu0
        %v1372 = vpop.f32.mrb[0].mxu0
        %v1373 = vadd.f32 %v906, %v1372
        %v1374 = vpop.f32.mrb[0].mxu0
        %1375 = vmatprep.mubr.bf16.mxu0 0
        %1376 = vmatmul.mubr.bf16.gmra.mrb[0].mxu0 %v859
        %v1377 = vpop.f32.mrb[0].mxu0
        %v1378 = vadd.f32 %v906, %v1377
        %v1379 = vpop.f32.mrb[0].mxu0
        %v1380 = vpop.f32.mrb[0].mxu0
        %v1381 = vadd.f32 %v906, %v1380
        %v1382 = vpop.f32.mrb[0].mxu0
        %1383 = vmatprep.mubr.bf16.mxu0 0
        %1384 = vmatmul.mubr.bf16.gmra.mrb[0].mxu0 %v860
        %v1385 = vpop.f32.mrb[0].mxu0
        %v1386 = vadd.f32 %v906, %v1385
        %v1387 = vpop.f32.mrb[0].mxu0
        %v1388 = vpop.f32.mrb[0].mxu0
        %v1389 = vadd.f32 %v906, %v1388
        %v1390 = vpop.f32.mrb[0].mxu0
        %1391 = vdwg.mxu0
        %v1392 = vpack.c.bf16 %v1077, %v1073
        %v1393 = vpack.c.bf16 %v1079, %v1075
        %v1394 = vpack.c.bf16 %v1269, %v1266
        %v1395 = vpack.c.bf16 %v1087, %v1083
        %v1396 = vpack.c.bf16 %v1089, %v1085
        %v1397 = vpack.c.bf16 %v1277, %v1274
        %v1398 = vpack.c.bf16 %v1097, %v1093
        %v1399 = vpack.c.bf16 %v1099, %v1095
        %v1400 = vpack.c.bf16 %v1285, %v1282
        %v1401 = vpack.c.bf16 %v1107, %v1103
        %v1402 = vpack.c.bf16 %v1109, %v1105
        %v1403 = vpack.c.bf16 %v1293, %v1290
        %v1404 = vpack.c.bf16 %v1117, %v1113
        %v1405 = vpack.c.bf16 %v1119, %v1115
        %v1406 = vpack.c.bf16 %v1301, %v1298
        %v1407 = vpack.c.bf16 %v1127, %v1123
        %v1408 = vpack.c.bf16 %v1129, %v1125
        %v1409 = vpack.c.bf16 %v1309, %v1306
        %v1410 = vpack.c.bf16 %v1137, %v1133
        %v1411 = vpack.c.bf16 %v1139, %v1135
        %v1412 = vpack.c.bf16 %v1317, %v1314
        %v1413 = vpack.c.bf16 %v1147, %v1143
        %v1414 = vpack.c.bf16 %v1149, %v1145
        %v1415 = vpack.c.bf16 %v1325, %v1322
        %v1416 = vpack.c.bf16 %v1157, %v1153
        %v1417 = vpack.c.bf16 %v1159, %v1155
        %v1418 = vpack.c.bf16 %v1333, %v1330
        %v1419 = vpack.c.bf16 %v1167, %v1163
        %v1420 = vpack.c.bf16 %v1169, %v1165
        %v1421 = vpack.c.bf16 %v1341, %v1338
        %v1422 = vpack.c.bf16 %v1177, %v1173
        %v1423 = vpack.c.bf16 %v1179, %v1175
        %v1424 = vpack.c.bf16 %v1349, %v1346
        %v1425 = vpack.c.bf16 %v1187, %v1183
        %v1426 = vpack.c.bf16 %v1189, %v1185
        %v1427 = vpack.c.bf16 %v1357, %v1354
        %v1428 = vpack.c.bf16 %v1197, %v1193
        %v1429 = vpack.c.bf16 %v1199, %v1195
        %v1430 = vpack.c.bf16 %v1365, %v1362
        %v1431 = vpack.c.bf16 %v1207, %v1203
        %v1432 = vpack.c.bf16 %v1209, %v1205
        %v1433 = vpack.c.bf16 %v1373, %v1370
        %v1434 = vpack.c.bf16 %v1217, %v1213
        %v1435 = vpack.c.bf16 %v1219, %v1215
        %v1436 = vpack.c.bf16 %v1381, %v1378
        %v1437 = vpack.c.bf16 %v1227, %v1223
        %v1438 = vpack.c.bf16 %v1229, %v1225
        %v1439 = vpack.c.bf16 %v1389, %v1386
        %v1488 = vunpack.c.l.b16 %v1392
        %v1489 = vunpack.c.l.b16 %v1393
        %v1490 = vunpack.c.l.b16 %v1394
        %v1491 = vunpack.c.h.b16 %v1392
        %v1492 = vunpack.c.h.b16 %v1393
        %v1493 = vunpack.c.h.b16 %v1394
        %v1494 = vunpack.c.l.b16 %v1395
        %v1495 = vunpack.c.l.b16 %v1396
        %v1496 = vunpack.c.l.b16 %v1397
        %v1497 = vunpack.c.h.b16 %v1395
        %v1498 = vunpack.c.h.b16 %v1396
        %v1499 = vunpack.c.h.b16 %v1397
        %v1500 = vunpack.c.l.b16 %v1398
        %v1501 = vunpack.c.l.b16 %v1399
        %v1502 = vunpack.c.l.b16 %v1400
        %v1503 = vunpack.c.h.b16 %v1398
        %v1504 = vunpack.c.h.b16 %v1399
        %v1505 = vunpack.c.h.b16 %v1400
        %v1506 = vunpack.c.l.b16 %v1401
        %v1507 = vunpack.c.l.b16 %v1402
        %v1508 = vunpack.c.l.b16 %v1403
        %v1509 = vunpack.c.h.b16 %v1401
        %v1510 = vunpack.c.h.b16 %v1402
        %v1511 = vunpack.c.h.b16 %v1403
        %v1512 = vunpack.c.l.b16 %v1404
        %v1513 = vunpack.c.l.b16 %v1405
        %v1514 = vunpack.c.l.b16 %v1406
        %v1515 = vunpack.c.h.b16 %v1404
        %v1516 = vunpack.c.h.b16 %v1405
        %v1517 = vunpack.c.h.b16 %v1406
        %v1518 = vunpack.c.l.b16 %v1407
        %v1519 = vunpack.c.l.b16 %v1408
        %v1520 = vunpack.c.l.b16 %v1409
        %v1521 = vunpack.c.h.b16 %v1407
        %v1522 = vunpack.c.h.b16 %v1408
        %v1523 = vunpack.c.h.b16 %v1409
        %v1524 = vunpack.c.l.b16 %v1410
        %v1525 = vunpack.c.l.b16 %v1411
        %v1526 = vunpack.c.l.b16 %v1412
        %v1527 = vunpack.c.h.b16 %v1410
        %v1528 = vunpack.c.h.b16 %v1411
        %v1529 = vunpack.c.h.b16 %v1412
        %v1530 = vunpack.c.l.b16 %v1413
        %v1531 = vunpack.c.l.b16 %v1414
        %v1532 = vunpack.c.l.b16 %v1415
        %v1533 = vunpack.c.h.b16 %v1413
        %v1534 = vunpack.c.h.b16 %v1414
        %v1535 = vunpack.c.h.b16 %v1415
        %v1536 = vunpack.c.l.b16 %v1416
        %v1537 = vunpack.c.l.b16 %v1417
        %v1538 = vunpack.c.l.b16 %v1418
        %v1539 = vunpack.c.h.b16 %v1416
        %v1540 = vunpack.c.h.b16 %v1417
        %v1541 = vunpack.c.h.b16 %v1418
        %v1542 = vunpack.c.l.b16 %v1419
        %v1543 = vunpack.c.l.b16 %v1420
        %v1544 = vunpack.c.l.b16 %v1421
        %v1545 = vunpack.c.h.b16 %v1419
        %v1546 = vunpack.c.h.b16 %v1420
        %v1547 = vunpack.c.h.b16 %v1421
        %v1548 = vunpack.c.l.b16 %v1422
        %v1549 = vunpack.c.l.b16 %v1423
        %v1550 = vunpack.c.l.b16 %v1424
        %v1551 = vunpack.c.h.b16 %v1422
        %v1552 = vunpack.c.h.b16 %v1423
        %v1553 = vunpack.c.h.b16 %v1424
        %v1554 = vunpack.c.l.b16 %v1425
        %v1555 = vunpack.c.l.b16 %v1426
        %v1556 = vunpack.c.l.b16 %v1427
        %v1557 = vunpack.c.h.b16 %v1425
        %v1558 = vunpack.c.h.b16 %v1426
        %v1559 = vunpack.c.h.b16 %v1427
        %v1560 = vunpack.c.l.b16 %v1428
        %v1561 = vunpack.c.l.b16 %v1429
        %v1562 = vunpack.c.l.b16 %v1430
        %v1563 = vunpack.c.h.b16 %v1428
        %v1564 = vunpack.c.h.b16 %v1429
        %v1565 = vunpack.c.h.b16 %v1430
        %v1566 = vunpack.c.l.b16 %v1431
        %v1567 = vunpack.c.l.b16 %v1432
        %v1568 = vunpack.c.l.b16 %v1433
        %v1569 = vunpack.c.h.b16 %v1431
        %v1570 = vunpack.c.h.b16 %v1432
        %v1571 = vunpack.c.h.b16 %v1433
        %v1572 = vunpack.c.l.b16 %v1434
        %v1573 = vunpack.c.l.b16 %v1435
        %v1574 = vunpack.c.l.b16 %v1436
        %v1575 = vunpack.c.h.b16 %v1434
        %v1576 = vunpack.c.h.b16 %v1435
        %v1577 = vunpack.c.h.b16 %v1436
        %v1578 = vunpack.c.l.b16 %v1437
        %v1579 = vunpack.c.l.b16 %v1438
        %v1580 = vunpack.c.l.b16 %v1439
        %v1581 = vunpack.c.h.b16 %v1437
        %v1582 = vunpack.c.h.b16 %v1438
        %v1583 = vunpack.c.h.b16 %v1439
        %v1584 = vpack.c.b16 %v1489, %v1488
        %v1585 = vpack.c.b16 %v1490, %v1490
        %v1586 = vpack.c.b16 %v1492, %v1491
        %v1587 = vpack.c.b16 %v1493, %v1493
        %v1588 = vpack.c.b16 %v1495, %v1494
        %v1589 = vpack.c.b16 %v1496, %v1496
        %v1590 = vpack.c.b16 %v1498, %v1497
        %v1591 = vpack.c.b16 %v1499, %v1499
        %v1592 = vpack.c.b16 %v1501, %v1500
        %v1593 = vpack.c.b16 %v1502, %v1502
        %v1594 = vpack.c.b16 %v1504, %v1503
        %v1595 = vpack.c.b16 %v1505, %v1505
        %v1596 = vpack.c.b16 %v1507, %v1506
        %v1597 = vpack.c.b16 %v1508, %v1508
        %v1598 = vpack.c.b16 %v1510, %v1509
        %v1599 = vpack.c.b16 %v1511, %v1511
        %v1600 = vpack.c.b16 %v1513, %v1512
        %v1601 = vpack.c.b16 %v1514, %v1514
        %v1602 = vpack.c.b16 %v1516, %v1515
        %v1603 = vpack.c.b16 %v1517, %v1517
        %v1604 = vpack.c.b16 %v1519, %v1518
        %v1605 = vpack.c.b16 %v1520, %v1520
        %v1606 = vpack.c.b16 %v1522, %v1521
        %v1607 = vpack.c.b16 %v1523, %v1523
        %v1608 = vpack.c.b16 %v1525, %v1524
        %v1609 = vpack.c.b16 %v1526, %v1526
        %v1610 = vpack.c.b16 %v1528, %v1527
        %v1611 = vpack.c.b16 %v1529, %v1529
        %v1612 = vpack.c.b16 %v1531, %v1530
        %v1613 = vpack.c.b16 %v1532, %v1532
        %v1614 = vpack.c.b16 %v1534, %v1533
        %v1615 = vpack.c.b16 %v1535, %v1535
        %v1616 = vpack.c.b16 %v1537, %v1536
        %v1617 = vpack.c.b16 %v1538, %v1538
        %v1618 = vpack.c.b16 %v1540, %v1539
        %v1619 = vpack.c.b16 %v1541, %v1541
        %v1620 = vpack.c.b16 %v1543, %v1542
        %v1621 = vpack.c.b16 %v1544, %v1544
        %v1622 = vpack.c.b16 %v1546, %v1545
        %v1623 = vpack.c.b16 %v1547, %v1547
        %v1624 = vpack.c.b16 %v1549, %v1548
        %v1625 = vpack.c.b16 %v1550, %v1550
        %v1626 = vpack.c.b16 %v1552, %v1551
        %v1627 = vpack.c.b16 %v1553, %v1553
        %v1628 = vpack.c.b16 %v1555, %v1554
        %v1629 = vpack.c.b16 %v1556, %v1556
        %v1630 = vpack.c.b16 %v1558, %v1557
        %v1631 = vpack.c.b16 %v1559, %v1559
        %v1632 = vpack.c.b16 %v1561, %v1560
        %v1633 = vpack.c.b16 %v1562, %v1562
        %v1634 = vpack.c.b16 %v1564, %v1563
        %v1635 = vpack.c.b16 %v1565, %v1565
        %v1636 = vpack.c.b16 %v1567, %v1566
        %v1637 = vpack.c.b16 %v1568, %v1568
        %v1638 = vpack.c.b16 %v1570, %v1569
        %v1639 = vpack.c.b16 %v1571, %v1571
        %v1640 = vpack.c.b16 %v1573, %v1572
        %v1641 = vpack.c.b16 %v1574, %v1574
        %v1642 = vpack.c.b16 %v1576, %v1575
        %v1643 = vpack.c.b16 %v1577, %v1577
        %v1644 = vpack.c.b16 %v1579, %v1578
        %v1645 = vpack.c.b16 %v1580, %v1580
        %v1646 = vpack.c.b16 %v1582, %v1581
        %v1647 = vpack.c.b16 %v1583, %v1583
        %1712 = vst [vmem:[%s298] sm:$0xff] %v1584
        %1713 = vst [vmem:[%s298 + $0x8] sm:$0xf] %v1585
        %1714 = vst [vmem:[%s298 + $0xc] sm:$0xff] %v1586
        %1715 = vst [vmem:[%s298 + $0x14] sm:$0xf] %v1587
        %1716 = vst [vmem:[%s298 + $0x18] sm:$0xff] %v1588
        %1717 = vst [vmem:[%s298 + $0x20] sm:$0xf] %v1589
        %1718 = vst [vmem:[%s298 + $0x24] sm:$0xff] %v1590
        %1719 = vst [vmem:[%s298 + $0x2c] sm:$0xf] %v1591
        %1720 = vst [vmem:[%s298 + $0x30] sm:$0xff] %v1592
        %1721 = vst [vmem:[%s298 + $0x38] sm:$0xf] %v1593
        %1722 = vst [vmem:[%s298 + $0x3c] sm:$0xff] %v1594
        %1723 = vst [vmem:[%s298 + $0x44] sm:$0xf] %v1595
        %1724 = vst [vmem:[%s298 + $0x48] sm:$0xff] %v1596
        %1725 = vst [vmem:[%s298 + $0x50] sm:$0xf] %v1597
        %1726 = vst [vmem:[%s298 + $0x54] sm:$0xff] %v1598
        %1727 = vst [vmem:[%s298 + $0x5c] sm:$0xf] %v1599
        %1728 = vst [vmem:[%s298 + $0x60] sm:$0xff] %v1600
        %1729 = vst [vmem:[%s298 + $0x68] sm:$0xf] %v1601
        %1730 = vst [vmem:[%s298 + $0x6c] sm:$0xff] %v1602
        %1731 = vst [vmem:[%s298 + $0x74] sm:$0xf] %v1603
        %1732 = vst [vmem:[%s298 + $0x78] sm:$0xff] %v1604
        %1733 = vst [vmem:[%s298 + $0x80] sm:$0xf] %v1605
        %1734 = vst [vmem:[%s298 + $0x84] sm:$0xff] %v1606
        %1735 = vst [vmem:[%s298 + $0x8c] sm:$0xf] %v1607
        %1736 = vst [vmem:[%s298 + $0x90] sm:$0xff] %v1608
        %1737 = vst [vmem:[%s298 + $0x98] sm:$0xf] %v1609
        %1738 = vst [vmem:[%s298 + $0x9c] sm:$0xff] %v1610
        %1739 = vst [vmem:[%s298 + $0xa4] sm:$0xf] %v1611
        %1740 = vst [vmem:[%s298 + $0xa8] sm:$0xff] %v1612
        %1741 = vst [vmem:[%s298 + $0xb0] sm:$0xf] %v1613
        %1742 = vst [vmem:[%s298 + $0xb4] sm:$0xff] %v1614
        %1743 = vst [vmem:[%s298 + $0xbc] sm:$0xf] %v1615
        %1744 = vst [vmem:[%s298 + $0xc0] sm:$0xff] %v1616
        %1745 = vst [vmem:[%s298 + $0xc8] sm:$0xf] %v1617
        %1746 = vst [vmem:[%s298 + $0xcc] sm:$0xff] %v1618
        %1747 = vst [vmem:[%s298 + $0xd4] sm:$0xf] %v1619
        %1748 = vst [vmem:[%s298 + $0xd8] sm:$0xff] %v1620
        %1749 = vst [vmem:[%s298 + $0xe0] sm:$0xf] %v1621
        %1750 = vst [vmem:[%s298 + $0xe4] sm:$0xff] %v1622
        %1751 = vst [vmem:[%s298 + $0xec] sm:$0xf] %v1623
        %1752 = vst [vmem:[%s298 + $0xf0] sm:$0xff] %v1624
        %1753 = vst [vmem:[%s298 + $0xf8] sm:$0xf] %v1625
        %1754 = vst [vmem:[%s298 + $0xfc] sm:$0xff] %v1626
        %1755 = vst [vmem:[%s298 + $0x104] sm:$0xf] %v1627
        %1756 = vst [vmem:[%s298 + $0x108] sm:$0xff] %v1628
        %1757 = vst [vmem:[%s298 + $0x110] sm:$0xf] %v1629
        %1758 = vst [vmem:[%s298 + $0x114] sm:$0xff] %v1630
        %1759 = vst [vmem:[%s298 + $0x11c] sm:$0xf] %v1631
        %1760 = vst [vmem:[%s298 + $0x120] sm:$0xff] %v1632
        %1761 = vst [vmem:[%s298 + $0x128] sm:$0xf] %v1633
        %1762 = vst [vmem:[%s298 + $0x12c] sm:$0xff] %v1634
        %1763 = vst [vmem:[%s298 + $0x134] sm:$0xf] %v1635
        %1764 = vst [vmem:[%s298 + $0x138] sm:$0xff] %v1636
        %1765 = vst [vmem:[%s298 + $0x140] sm:$0xf] %v1637
        %1766 = vst [vmem:[%s298 + $0x144] sm:$0xff] %v1638
        %1767 = vst [vmem:[%s298 + $0x14c] sm:$0xf] %v1639
        %1768 = vst [vmem:[%s298 + $0x150] sm:$0xff] %v1640
        %1769 = vst [vmem:[%s298 + $0x158] sm:$0xf] %v1641
        %1770 = vst [vmem:[%s298 + $0x15c] sm:$0xff] %v1642
        %1771 = vst [vmem:[%s298 + $0x164] sm:$0xf] %v1643
        %1772 = vst [vmem:[%s298 + $0x168] sm:$0xff] %v1644
        %1773 = vst [vmem:[%s298 + $0x170] sm:$0xf] %v1645
        %1774 = vst [vmem:[%s298 + $0x174] sm:$0xff] %v1646
        %1775 = vst [vmem:[%s298 + $0x17c] sm:$0xf] %v1647
        %s1776 = sand.u32 %s163, 1
        %s1777 = scalar_lea.sflag [#allocation4], %s1776
        %s1778 = sand.u32 %s163, 1
        %s1779 = smul.addr %s1778, 384
        %s1780 = scalar_lea.vmem [#allocation8], %s1779
        // Predicated region
        $region57: #{tpu_custom_call.1} parent=43 // pred_check
          %p1781 = pneg %p173
        $region58: #{tpu_custom_call.1} parent=43 // pred_check_branch
          %1783 = sbr.rel (%p1781) target = $region60
        $region59: #{tpu_custom_call.1} parent=43 // pred_region
          %s1785 = ssub.s32 6144, 6144
          %1786 = vsyncadd %s1777, %s1785
          %s1787 = smul.addr %s24, 96
          %s1788 = smul.addr %s1787, 64
          %s1789 = scalar_lea.hbm %s6, %s1788
          %s1790 = sshll.u32 %s1780, 4
          %s1791 = int_to_ptr.vmem [resolvable:$true] %s1790
          %1796 = dma.vmem_to_hbm [thread:$0]  %s1791, 6144, %s1789, %s1777, 192, 192, 12
        $region60: #{tpu_custom_call.1} parent=43 // pred_fallthru
          _
      $region44: #{tpu_custom_call.1} parent=5 // pred_fallthru
        _
      %p1797 = scmp.le.s32.totalorder 2, %s19
      // Predicated region
      $region61: #{tpu_custom_call.1} parent=5 // pred_check
        %p1798 = pneg %p1797
      $region62: #{tpu_custom_call.1} parent=5 // pred_check_branch
        %1800 = sbr.rel (%p1798) target = $region64
      $region63: #{tpu_custom_call.1} parent=5 // pred_region
        %s1801 = ssub.s32 %s19, 2
        // Predicated region
        $region65: #{tpu_custom_call.1} parent=63 // pred_check
          %p1802 = pneg %p179
        $region66: #{tpu_custom_call.1} parent=63 // pred_check_branch
          %1804 = sbr.rel (%p1802) target = $region68
        $region67: #{tpu_custom_call.1} parent=63 // pred_region
          %s1805 = sand.u32 %s164, 1
          %s1806 = scalar_lea.sflag [#allocation4], %s1805
          %s1807 = sand.u32 %s164, 1
          %s1808 = smul.addr %s1807, 384
          %s1809 = scalar_lea.vmem [#allocation8], %s1808
          %1810 = dma.done %s1806, 6144
        $region68: #{tpu_custom_call.1} parent=63 // pred_fallthru
          _
      $region64: #{tpu_custom_call.1} parent=5 // pred_fallthru
        _
    $region6: #{tpu_custom_call.1} parent=1 // loop_footer
      %s23 = sadd.s32 1, %s19
    $region7: #{tpu_custom_call.1} parent=1 // loop_footer_branch
      %18 = sbr.rel target = $region3
    $region8: #{tpu_custom_call.1} parent=1 // loop_exit
      _
    %1811 = vsyncpa [#allocation3], 1
    %s1812 = scalar_lea.sflag [#allocation3], 1
    %1813 = vsyncpa %s1812, 1
    %1814 = vsyncpa [#allocation6], 1
    %1815 = vsyncpa [#allocation4], 1
    %s1816 = scalar_lea.sflag [#allocation4], 1
    %1817 = vsyncpa %s1816, 1

</llo_original>
